<compile_context>
chip_gen: v6e
topology: v6e:2x2x1
jax: 0.10.0
libtpu: 0.0.40
codegen_flags: <defaults>
</compile_context>

<pallas_src>
import functools

import jax
import jax.numpy as jnp
from jax.experimental import pallas as pl
from jax.experimental.pallas import tpu as pltpu


LRELU_SLOPE = 0.2


def _round_up(x, m):
    return (x + m - 1) // m * m


def _vmem_limit_bytes():
    # v5e/v6e: 128 MiB physical VMEM -> 64 MiB scoped limit.
    # v7x: 64 MiB physical -> keep the 32 MiB default-ish limit.
    try:
        info = pltpu.get_tpu_info()
        cap = int(getattr(info, "vmem_capacity_bytes", 64 * 1024 * 1024))
    except Exception:
        cap = 64 * 1024 * 1024
    return 64 * 1024 * 1024 if cap >= 96 * 1024 * 1024 else 32 * 1024 * 1024


_VMEM_LIMIT = _vmem_limit_bytes()
_VMEM_BUDGET = int(_VMEM_LIMIT * 0.7)   # working-set target used for tile sizing


# ---------------------------------------------------------------------------
# Pallas kernels
# ---------------------------------------------------------------------------
def _fused_conv_kernel(x_ref, w_ref, b_ref, o_ref, *, taps, slope):
    """Fused reflect-padded 4x4/stride-2 conv + bias + LeakyReLU.

    x_ref: [tb, 4, C, lseg]  bf16 parity planes, per-image flattened (+halo).
    w_ref: [16, OCt, C]      bf16 per-tap weights.
    b_ref: [OCt, 1]          f32 bias.
    o_ref: [tb, OCt, lout]   flattened conv output (garbage at invalid
                             positions; sliced off by the wrapper).
    """
    tb = o_ref.shape[0]
    lout = o_ref.shape[-1]
    for bidx in range(tb):
        acc = jnp.zeros(o_ref.shape[1:], jnp.float32)
        for p in range(4):
            xp = x_ref[bidx, p]                       # [C, lseg] bf16
            for (t, d) in taps[p]:
                acc = acc + jnp.dot(w_ref[t], xp[:, d:d + lout],
                                    preferred_element_type=jnp.float32)
        y = acc + b_ref[...]
        y = jnp.maximum(y, slope * y)                 # LeakyReLU, one VPU max
        o_ref[bidx] = y.astype(o_ref.dtype)


def _fused_conv_head_kernel(x_ref, w_ref, b_ref, w3_ref, b3_ref, o_ref, *,
                            taps, slope):
    """Last Conv2dBlock fused with the trailing 1x1 conv (OC=1).

    Same as _fused_conv_kernel, but the epilogue does
    out[1, M] = w3[1, OC] @ lrelu(conv)[OC, M] + b3 on the MXU.
    """
    tb = o_ref.shape[0]
    lout = o_ref.shape[-1]
    ocp = w_ref.shape[1]
    for bidx in range(tb):
        acc = jnp.zeros((ocp, lout), jnp.float32)
        for p in range(4):
            xp = x_ref[bidx, p]
            for (t, d) in taps[p]:
                acc = acc + jnp.dot(w_ref[t], xp[:, d:d + lout],
                                    preferred_element_type=jnp.float32)
        y = acc + b_ref[...]
        y = jnp.maximum(y, slope * y)
        o = jnp.dot(w3_ref[...], y.astype(jnp.bfloat16),
                    preferred_element_type=jnp.float32) + b3_ref[...]
        o_ref[bidx] = o


def _avgpool_kernel(xs_ref, r_ref, o_ref):
    """3x3 / stride-2 window sum from 4 parity planes, scaled by the
    reciprocal of the valid (non-padded) cell count."""
    tb, oh, ow = o_ref.shape
    xs = xs_ref[...]
    acc = jnp.zeros((tb, oh, ow), jnp.float32)
    for ri in (0, 1):
        for rj in (0, 1):
            p = 2 * ri + rj
            for pi in ((0, 1) if ri == 0 else (0,)):
                for pj in ((0, 1) if rj == 0 else (0,)):
                    acc = acc + xs[p, :, pi:pi + oh, pj:pj + ow]
    o_ref[...] = acc * r_ref[...]


# ---------------------------------------------------------------------------
# Conv2dBlock wrappers (data staging + pallas_call)
# ---------------------------------------------------------------------------
_PAD_MODES = {"reflect": "reflect", "replicate": "edge", "zero": "constant"}


def _prep_parity_flat(x, pad, pad_type):
    """x: [N, C, H, W] -> parity-split, per-image flattened bf16 slab.

    Returns (xs [N, 4, C, lseg] bf16, geometry dict).  Total bytes ~= the
    (padded) activation; no k^2/s^2 im2col inflation.
    """
    n, c, h, w = x.shape
    mode = _PAD_MODES.get(pad_type, "constant")
    xp = jnp.pad(x, ((0, 0), (0, 0), (pad, pad), (pad, pad)), mode=mode)
    hp, wp = h + 2 * pad, w + 2 * pad
    oh = (hp - 4) // 2 + 1
    ow = (wp - 4) // 2 + 1
    hpe, wpe = _round_up(hp, 2), _round_up(wp, 2)
    if hpe != hp or wpe != wp:
        xp = jnp.pad(xp, ((0, 0), (0, 0), (0, hpe - hp), (0, wpe - wp)))
    hh, wh = hpe // 2, wpe // 2
    # stride-2 parity split -> 4 unit-stride planes [N, 4, C, hh, wh]
    xs = jnp.stack([xp[:, :, ri::2, rj::2] for ri in (0, 1) for rj in (0, 1)],
                   axis=1)
    lpi = hh * wh
    lout = _round_up(lpi, 128)          # lane-dense output length per image
    halo = _round_up(wh + 2, 128)       # room for the {1, wh, wh+1} tap shifts
    lseg = lout + halo
    xs = xs.reshape(n, 4, c, lpi)
    xs = jnp.pad(xs, ((0, 0), (0, 0), (0, 0), (0, lseg - lpi)))
    geom = dict(n=n, hh=hh, wh=wh, oh=oh, ow=ow, lpi=lpi, lout=lout, lseg=lseg)
    return xs.astype(jnp.bfloat16), geom


def _tap_table(wh):
    """Per parity plane: the 4 (weight tap index, flat shift) pairs."""
    taps = []
    for pr in (0, 1):
        for pc in (0, 1):
            plane = []
            for si in (0, 1):
                for sj in (0, 1):
                    di, dj = 2 * si + pr, 2 * sj + pc
                    plane.append((di * 4 + dj, si * wh + sj))
            taps.append(tuple(plane))
    return tuple(taps)


def _conv_tiles(c, oc_pad, lseg, lout, n, allow_oc_split=True):
    """Pick (images per tile, OC tile) from the VMEM budget."""
    c_t = _round_up(c, 16)
    oc_t = oc_pad
    if allow_oc_split:
        while oc_t > 256 and (oc_t // 2) % 16 == 0:
            oc_t //= 2
        # expose >= 2 parallel tiles for v7x megacore when batch does not
        if n == 1 and oc_t == oc_pad and oc_pad >= 32 and (oc_pad // 2) % 16 == 0:
            oc_t = oc_pad // 2
    w_bytes = 16 * oc_pad * _round_up(c, 128) * 2 * 2

    def step_bytes(tb):
        return (tb * 4 * c_t * lseg * 2 * 2        # x block (double buffered)
                + tb * oc_t * lout * 4 * 2         # out block (double buffered)
                + oc_t * lout * 4                  # f32 accumulator value
                + 4 * c_t * lout * 2 * 4           # shifted-tap temporaries
                + w_bytes)

    tb = min(max(n, 1), 8)                         # cap loop unrolling
    while tb > 1 and step_bytes(tb) > _VMEM_BUDGET:
        tb -= 1
    return tb, oc_t


def conv2d_block(x, blk):
    """x: [N, C, H, W]; returns lrelu(conv4x4/s2/p1(x)) as [N, OC, OH, OW] bf16."""
    n, c = x.shape[0], x.shape[1]
    xs, g = _prep_parity_flat(x, blk["pad"], blk["pad_type"])
    oc, oc_pad = blk["oc"], blk["w"].shape[1]
    tb, oc_t = _conv_tiles(c, oc_pad, g["lseg"], g["lout"], n)
    n_pad = _round_up(n, tb)
    if n_pad != n:
        xs = jnp.pad(xs, ((0, n_pad - n), (0, 0), (0, 0), (0, 0)))
    taps = _tap_table(g["wh"])
    lseg, lout = g["lseg"], g["lout"]
    out = pl.pallas_call(
        functools.partial(_fused_conv_kernel, taps=taps, slope=LRELU_SLOPE),
        out_shape=jax.ShapeDtypeStruct((n_pad, oc_pad, lout), jnp.bfloat16),
        grid=(n_pad // tb, oc_pad // oc_t),
        in_specs=[
            pl.BlockSpec((tb, 4, c, lseg), lambda i, j: (i, 0, 0, 0)),
            pl.BlockSpec((16, oc_t, c), lambda i, j: (0, j, 0)),
            pl.BlockSpec((oc_t, 1), lambda i, j: (j, 0)),
        ],
        out_specs=pl.BlockSpec((tb, oc_t, lout), lambda i, j: (i, j, 0)),
        compiler_params=pltpu.CompilerParams(
            dimension_semantics=("parallel", "parallel"),
            vmem_limit_bytes=_VMEM_LIMIT),
    )(xs, blk["w"], blk["b"])
    out = out[:n, :oc, :g["lpi"]]
    out = out.reshape(n, oc, g["hh"], g["wh"])[:, :, :g["oh"], :g["ow"]]
    return out


def conv2d_block_head(x, blk, head):
    """Last Conv2dBlock + fused trailing 1x1 conv; returns [N, 1, OH, OW] f32."""
    n, c = x.shape[0], x.shape[1]
    xs, g = _prep_parity_flat(x, blk["pad"], blk["pad_type"])
    oc_pad = blk["w"].shape[1]
    tb, _ = _conv_tiles(c, oc_pad, g["lseg"], g["lout"], n, allow_oc_split=False)
    n_pad = _round_up(n, tb)
    if n_pad != n:
        xs = jnp.pad(xs, ((0, n_pad - n), (0, 0), (0, 0), (0, 0)))
    taps = _tap_table(g["wh"])
    lseg, lout = g["lseg"], g["lout"]
    out = pl.pallas_call(
        functools.partial(_fused_conv_head_kernel, taps=taps, slope=LRELU_SLOPE),
        out_shape=jax.ShapeDtypeStruct((n_pad, 1, lout), jnp.float32),
        grid=(n_pad // tb,),
        in_specs=[
            pl.BlockSpec((tb, 4, c, lseg), lambda i: (i, 0, 0, 0)),
            pl.BlockSpec((16, oc_pad, c), lambda i: (0, 0, 0)),
            pl.BlockSpec((oc_pad, 1), lambda i: (0, 0)),
            pl.BlockSpec((1, oc_pad), lambda i: (0, 0)),
            pl.BlockSpec((1, 1), lambda i: (0, 0)),
        ],
        out_specs=pl.BlockSpec((tb, 1, lout), lambda i: (i, 0, 0)),
        compiler_params=pltpu.CompilerParams(
            dimension_semantics=("parallel",),
            vmem_limit_bytes=_VMEM_LIMIT),
    )(xs, blk["w"], blk["b"], head["w"], head["b"])
    out = out[:n, :, :g["lpi"]]
    out = out.reshape(n, 1, g["hh"], g["wh"])[:, :, :g["oh"], :g["ow"]]
    return out


# ---------------------------------------------------------------------------
# AvgPool2d(3, stride=2, padding=1, count_include_pad=False), NCHW
# ---------------------------------------------------------------------------
def avgpool_3x3_s2_p1(x):
    """x: [N, C, H, W] f32 -> [N, C, OH, OW] f32."""
    n, c, h, w = x.shape
    oh = (h - 1) // 2 + 1
    ow = (w - 1) // 2 + 1
    cn = n * c
    hp = _round_up(h + 2, 2)
    wp = _round_up(w + 2, 2)
    xp = jnp.pad(x.reshape(cn, h, w), ((0, 0), (1, hp - h - 1), (1, wp - w - 1)))
    hh, wh = hp // 2, wp // 2
    xs = jnp.stack([xp[:, ri::2, rj::2] for ri in (0, 1) for rj in (0, 1)],
                   axis=0)

    # reciprocal of number of non-padded cells per window
    r_idx = jnp.arange(oh)
    c_idx = jnp.arange(ow)
    vr = jnp.minimum(2 * r_idx + 1, h - 1) - jnp.maximum(2 * r_idx - 1, 0) + 1
    vc = jnp.minimum(2 * c_idx + 1, w - 1) - jnp.maximum(2 * c_idx - 1, 0) + 1
    recip = (1.0 / (vr[:, None] * vc[None, :]).astype(jnp.float32))[None]

    # VMEM-aware channel tile (old fixed 256 cap overflows VMEM at large H, W).
    hh_t, wh_t = _round_up(hh, 8), _round_up(wh, 128)
    oh_t, ow_t = _round_up(oh, 8), _round_up(ow, 128)
    per_cn = 4 * hh_t * wh_t * 4 * 3 + oh_t * ow_t * 4 * 2
    tb = min(cn, max(_VMEM_BUDGET // per_cn, 8), 512)
    tb = max(8, (tb // 8) * 8)
    # TODO(synk): spatial tiling for images so large that even tb=8 exceeds VMEM.
    cn_pad = _round_up(cn, tb)
    if cn_pad != cn:
        xs = jnp.pad(xs, ((0, 0), (0, cn_pad - cn), (0, 0), (0, 0)))

    out = pl.pallas_call(
        _avgpool_kernel,
        out_shape=jax.ShapeDtypeStruct((cn_pad, oh, ow), jnp.float32),
        grid=(cn_pad // tb,),
        in_specs=[
            pl.BlockSpec((4, tb, hh, wh), lambda i: (0, i, 0, 0)),
            pl.BlockSpec((1, oh, ow), lambda i: (0, 0, 0)),
        ],
        out_specs=pl.BlockSpec((tb, oh, ow), lambda i: (i, 0, 0)),
        compiler_params=pltpu.CompilerParams(
            dimension_semantics=("parallel",),
            vmem_limit_bytes=_VMEM_LIMIT),
    )(xs, recip)
    return out[:cn].reshape(n, c, oh, ow)


# ---------------------------------------------------------------------------
# MsImageDis (multi-scale discriminator) parameters + forward
# ---------------------------------------------------------------------------
def init_ms_image_dis(key, input_dim, dis_cfg):
    n_layer = dis_cfg["n_layer"]
    base_dim = dis_cfg["dim"]
    num_scales = dis_cfg["num_scales"]
    pad_type = dis_cfg["pad_type"]
    scales = []
    for _ in range(num_scales):
        blocks = []
        d_in, d_out = input_dim, base_dim
        for _ in range(n_layer):  # Conv2dBlock(k=4, s=2, p=1) + lrelu
            key, kw, kb = jax.random.split(key, 3)
            fan_in = d_in * 4 * 4
            w = jax.random.normal(kw, (d_out, d_in, 4, 4), jnp.float32) / jnp.sqrt(fan_in)
            b = jax.random.normal(kb, (d_out,), jnp.float32) * 0.01
            oc_pad = _round_up(d_out, 16)   # bf16 sublane multiple
            w_taps = jnp.transpose(w, (2, 3, 0, 1)).reshape(16, d_out, d_in)
            w_taps = jnp.pad(w_taps, ((0, 0), (0, oc_pad - d_out), (0, 0)))
            b_pad = jnp.pad(b, (0, oc_pad - d_out)).reshape(-1, 1)
            blocks.append(dict(w=w_taps.astype(jnp.bfloat16), b=b_pad,
                               oc=d_out, pad=1, pad_type=pad_type))
            d_in, d_out = d_out, d_out * 2
        # final 1x1 conv -> 1 channel, no activation (fused into last block)
        key, kw, kb = jax.random.split(key, 3)
        oc_pad_last = blocks[-1]["w"].shape[1]
        w3 = jax.random.normal(kw, (d_in,), jnp.float32) / jnp.sqrt(d_in)
        w3_row = jnp.pad(w3, (0, oc_pad_last - d_in)).reshape(1, -1).astype(jnp.bfloat16)
        b3 = jax.random.normal(kb, (1, 1), jnp.float32) * 0.01
        scales.append(dict(blocks=blocks, head=dict(w=w3_row, b=b3)))
    return scales


def ms_image_dis_forward(x_nchw, scale_params):
    """x: NCHW f32; returns list of per-scale NCHW [N, 1, OH_s, OW_s] maps."""
    x = x_nchw.astype(jnp.float32)
    outputs = []
    n_scales = len(scale_params)
    for s, sc in enumerate(scale_params):
        y = x
        for blk in sc["blocks"][:-1]:
            y = conv2d_block(y, blk)
        outputs.append(conv2d_block_head(y, sc["blocks"][-1], sc["head"]))
        if s < n_scales - 1:
            x = avgpool_3x3_s2_p1(x)
    return outputs


# ---------------------------------------------------------------------------
# Discriminators (dict of MsImageDis, one per satellite/domain)
# ---------------------------------------------------------------------------
class Discriminators:
    def __init__(self, params, key):
        self.params = params
        self.models = {}
        for name, item in params["data"].items():
            key, sub = jax.random.split(key)
            self.models[name] = init_ms_image_dis(sub, item["dim"], params["dis"])

    def __call__(self, x, name):
        return ms_image_dis_forward(x, self.models[name])

    def add_domain(self, name, dim, key):
        self.models[name] = init_ms_image_dis(key, dim, self.params["dis"])


# ---------------------------------------------------------------------------
# Pure-JAX reference (for numeric self-check; mirrors bf16 rounding points)
# ---------------------------------------------------------------------------
def _ref_ms_image_dis(x_nchw, scale_params):
    def conv_block_ref(x, blk):
        oc = blk["oc"]
        c = x.shape[1]
        wt = blk["w"].astype(jnp.float32)                     # [16, OC_pad, C]
        w = wt.reshape(4, 4, wt.shape[1], c)[:, :, :oc, :]
        w = jnp.transpose(w, (2, 3, 0, 1))                    # [OC, C, 4, 4]
        b = blk["b"][:oc, 0]
        xp = jnp.pad(x, ((0, 0), (0, 0), (1, 1), (1, 1)), mode="reflect")
        xp = xp.astype(jnp.bfloat16).astype(jnp.float32)
        y = jax.lax.conv_general_dilated(
            xp, w, (2, 2), "VALID",
            dimension_numbers=("NCHW", "OIHW", "NCHW"),
            precision=jax.lax.Precision.HIGHEST)
        y = y + b[None, :, None, None]
        return jnp.maximum(y, LRELU_SLOPE * y)

    def head_ref(y, blk, head):
        y = conv_block_ref(y, blk)
        oc = blk["oc"]
        w3 = head["w"].astype(jnp.float32)[0, :oc]
        yb = y.astype(jnp.bfloat16).astype(jnp.float32)
        o = jnp.einsum("nchw,c->nhw", yb, w3) + head["b"][0, 0]
        return o[:, None]

    def pool_ref(x):
        dims, strides = (1, 1, 3, 3), (1, 1, 2, 2)
        padc = ((0, 0), (0, 0), (1, 1), (1, 1))
        s = jax.lax.reduce_window(x, 0.0, jax.lax.add, dims, strides, padc)
        cnt = jax.lax.reduce_window(jnp.ones_like(x), 0.0, jax.lax.add,
                                    dims, strides, padc)
        return s / cnt

    x = x_nchw.astype(jnp.float32)
    outs = []
    for s, sc in enumerate(scale_params):
        y = x
        for blk in sc["blocks"][:-1]:
            y = conv_block_ref(y, blk).astype(jnp.bfloat16).astype(jnp.float32)
        outs.append(head_ref(y, sc["blocks"][-1], sc["head"]))
        if s < len(scale_params) - 1:
            x = pool_ref(x)
    return outs


if __name__ == "__main__":
    params = {
        "dis": {"n_layer": 2, "dim": 8, "norm": "none", "activ": "lrelu",
                "num_scales": 2, "gan_type": "lsgan", "pad_type": "reflect"},
        "data": {"sat_a": {"dim": 4}, "sat_b": {"dim": 4}},
    }
    key = jax.random.PRNGKey(0)
    key, init_key, x_key = jax.random.split(key, 3)

    disc = Discriminators(params, init_key)
    x = jax.random.normal(x_key, (2, 4, 16, 16), jnp.float32)  # NCHW

    outs = disc(x, "sat_a")
    for o in outs:
        jax.block_until_ready(o)

    expected = [(2, 1, 4, 4), (2, 1, 2, 2)]  # per-scale discriminator maps
    got = [tuple(o.shape) for o in outs]
    assert got == expected, (got, expected)
    assert all(bool(jnp.all(jnp.isfinite(o))) for o in outs)

    # numeric parity against a pure-JAX reference (loose tol: bf16 MXU path)
    refs = _ref_ms_image_dis(x, disc.models["sat_a"])
    for o, r in zip(outs, refs):
        assert bool(jnp.allclose(o, r, rtol=5e-2, atol=5e-2)), (
            float(jnp.max(jnp.abs(o - r))))
    print("KERNEL_OK")
</pallas_src>

<mosaic_0001>
module attributes {stable_mosaic.version = 11 : i64} {
  func.func @_fused_conv_kernel(%arg0: i32, %arg1: i32, %arg2: memref<2x4x4x256xbf16, #tpu.memory_space<vmem>>, %arg3: memref<16x16x4xbf16, #tpu.memory_space<vmem>>, %arg4: memref<16x1xf32, #tpu.memory_space<vmem>>, %arg5: memref<2x16x128xbf16, #tpu.memory_space<vmem>>) attributes {dimension_semantics = [#tpu.dimension_semantics<parallel>, #tpu.dimension_semantics<parallel>], iteration_bounds = array<i64: 1, 1>, scalar_prefetch = 0 : i64, scratch_operands = 0 : i64, tpu.core_type = #tpu.core_type<tc>, window_params = [{transform_indices = @transform_0, window_bounds = array<i64: 2, 4, 4, 256>}, {transform_indices = @transform_1, window_bounds = array<i64: 16, 16, 4>}, {transform_indices = @transform_2, window_bounds = array<i64: 16, 1>}, {transform_indices = @transform_3, window_bounds = array<i64: 2, 16, 128>}]} {
    %cst = arith.constant 0.000000e+00 : f32
    %0 = vector.broadcast %cst : f32 to vector<16x128xf32>
    %c0 = arith.constant 0 : index
    %c0_0 = arith.constant 0 : index
    %c0_1 = arith.constant 0 : index
    %c0_2 = arith.constant 0 : index
    %1 = vector.load %arg2[%c0, %c0_0, %c0_1, %c0_2] : memref<2x4x4x256xbf16, #tpu.memory_space<vmem>>, vector<1x1x4x256xbf16>
    %2 = vector.shape_cast %1 : vector<1x1x4x256xbf16> to vector<4x256xbf16>
    %c0_3 = arith.constant 0 : index
    %c0_4 = arith.constant 0 : index
    %c0_5 = arith.constant 0 : index
    %3 = vector.load %arg3[%c0_3, %c0_4, %c0_5] : memref<16x16x4xbf16, #tpu.memory_space<vmem>>, vector<1x16x4xbf16>
    %4 = vector.shape_cast %3 : vector<1x16x4xbf16> to vector<16x4xbf16>
    %5 = vector.extract_strided_slice %2 {offsets = [0, 0], sizes = [4, 128], strides = [1, 1]} : vector<4x256xbf16> to vector<4x128xbf16>
    %cst_6 = arith.constant dense<0.000000e+00> : vector<16x128xf32>
    %6 = tpu.matmul %4, %5, %cst_6 {dimension_numbers = #tpu.dot_dimension_numbers<[1], [0], [0], [1], [0, 0, 1, 1], [], []>} : vector<16x4xbf16>, vector<4x128xbf16>, vector<16x128xf32> -> vector<16x128xf32>
    %7 = arith.addf %0, %6 : vector<16x128xf32>
    %c2 = arith.constant 2 : index
    %c0_7 = arith.constant 0 : index
    %c0_8 = arith.constant 0 : index
    %8 = vector.load %arg3[%c2, %c0_7, %c0_8] : memref<16x16x4xbf16, #tpu.memory_space<vmem>>, vector<1x16x4xbf16>
    %9 = vector.shape_cast %8 : vector<1x16x4xbf16> to vector<16x4xbf16>
    %10 = vector.extract_strided_slice %2 {offsets = [0, 1], sizes = [4, 128], strides = [1, 1]} : vector<4x256xbf16> to vector<4x128xbf16>
    %cst_9 = arith.constant dense<0.000000e+00> : vector<16x128xf32>
    %11 = tpu.matmul %9, %10, %cst_9 {dimension_numbers = #tpu.dot_dimension_numbers<[1], [0], [0], [1], [0, 0, 1, 1], [], []>} : vector<16x4xbf16>, vector<4x128xbf16>, vector<16x128xf32> -> vector<16x128xf32>
    %12 = arith.addf %7, %11 : vector<16x128xf32>
    %c8 = arith.constant 8 : index
    %c0_10 = arith.constant 0 : index
    %c0_11 = arith.constant 0 : index
    %13 = vector.load %arg3[%c8, %c0_10, %c0_11] : memref<16x16x4xbf16, #tpu.memory_space<vmem>>, vector<1x16x4xbf16>
    %14 = vector.shape_cast %13 : vector<1x16x4xbf16> to vector<16x4xbf16>
    %15 = vector.extract_strided_slice %2 {offsets = [0, 9], sizes = [4, 128], strides = [1, 1]} : vector<4x256xbf16> to vector<4x128xbf16>
    %cst_12 = arith.constant dense<0.000000e+00> : vector<16x128xf32>
    %16 = tpu.matmul %14, %15, %cst_12 {dimension_numbers = #tpu.dot_dimension_numbers<[1], [0], [0], [1], [0, 0, 1, 1], [], []>} : vector<16x4xbf16>, vector<4x128xbf16>, vector<16x128xf32> -> vector<16x128xf32>
    %17 = arith.addf %12, %16 : vector<16x128xf32>
    %c10 = arith.constant 10 : index
    %c0_13 = arith.constant 0 : index
    %c0_14 = arith.constant 0 : index
    %18 = vector.load %arg3[%c10, %c0_13, %c0_14] : memref<16x16x4xbf16, #tpu.memory_space<vmem>>, vector<1x16x4xbf16>
    %19 = vector.shape_cast %18 : vector<1x16x4xbf16> to vector<16x4xbf16>
    %20 = vector.extract_strided_slice %2 {offsets = [0, 10], sizes = [4, 128], strides = [1, 1]} : vector<4x256xbf16> to vector<4x128xbf16>
    %cst_15 = arith.constant dense<0.000000e+00> : vector<16x128xf32>
    %21 = tpu.matmul %19, %20, %cst_15 {dimension_numbers = #tpu.dot_dimension_numbers<[1], [0], [0], [1], [0, 0, 1, 1], [], []>} : vector<16x4xbf16>, vector<4x128xbf16>, vector<16x128xf32> -> vector<16x128xf32>
    %22 = arith.addf %17, %21 : vector<16x128xf32>
    %c0_16 = arith.constant 0 : index
    %c1 = arith.constant 1 : index
    %c0_17 = arith.constant 0 : index
    %c0_18 = arith.constant 0 : index
    %23 = vector.load %arg2[%c0_16, %c1, %c0_17, %c0_18] : memref<2x4x4x256xbf16, #tpu.memory_space<vmem>>, vector<1x1x4x256xbf16>
    %24 = vector.shape_cast %23 : vector<1x1x4x256xbf16> to vector<4x256xbf16>
    %c1_19 = arith.constant 1 : index
    %c0_20 = arith.constant 0 : index
    %c0_21 = arith.constant 0 : index
    %25 = vector.load %arg3[%c1_19, %c0_20, %c0_21] : memref<16x16x4xbf16, #tpu.memory_space<vmem>>, vector<1x16x4xbf16>
    %26 = vector.shape_cast %25 : vector<1x16x4xbf16> to vector<16x4xbf16>
    %27 = vector.extract_strided_slice %24 {offsets = [0, 0], sizes = [4, 128], strides = [1, 1]} : vector<4x256xbf16> to vector<4x128xbf16>
    %cst_22 = arith.constant dense<0.000000e+00> : vector<16x128xf32>
    %28 = tpu.matmul %26, %27, %cst_22 {dimension_numbers = #tpu.dot_dimension_numbers<[1], [0], [0], [1], [0, 0, 1, 1], [], []>} : vector<16x4xbf16>, vector<4x128xbf16>, vector<16x128xf32> -> vector<16x128xf32>
    %29 = arith.addf %22, %28 : vector<16x128xf32>
    %c3 = arith.constant 3 : index
    %c0_23 = arith.constant 0 : index
    %c0_24 = arith.constant 0 : index
    %30 = vector.load %arg3[%c3, %c0_23, %c0_24] : memref<16x16x4xbf16, #tpu.memory_space<vmem>>, vector<1x16x4xbf16>
    %31 = vector.shape_cast %30 : vector<1x16x4xbf16> to vector<16x4xbf16>
    %32 = vector.extract_strided_slice %24 {offsets = [0, 1], sizes = [4, 128], strides = [1, 1]} : vector<4x256xbf16> to vector<4x128xbf16>
    %cst_25 = arith.constant dense<0.000000e+00> : vector<16x128xf32>
    %33 = tpu.matmul %31, %32, %cst_25 {dimension_numbers = #tpu.dot_dimension_numbers<[1], [0], [0], [1], [0, 0, 1, 1], [], []>} : vector<16x4xbf16>, vector<4x128xbf16>, vector<16x128xf32> -> vector<16x128xf32>
    %34 = arith.addf %29, %33 : vector<16x128xf32>
    %c9 = arith.constant 9 : index
    %c0_26 = arith.constant 0 : index
    %c0_27 = arith.constant 0 : index
    %35 = vector.load %arg3[%c9, %c0_26, %c0_27] : memref<16x16x4xbf16, #tpu.memory_space<vmem>>, vector<1x16x4xbf16>
    %36 = vector.shape_cast %35 : vector<1x16x4xbf16> to vector<16x4xbf16>
    %37 = vector.extract_strided_slice %24 {offsets = [0, 9], sizes = [4, 128], strides = [1, 1]} : vector<4x256xbf16> to vector<4x128xbf16>
    %cst_28 = arith.constant dense<0.000000e+00> : vector<16x128xf32>
    %38 = tpu.matmul %36, %37, %cst_28 {dimension_numbers = #tpu.dot_dimension_numbers<[1], [0], [0], [1], [0, 0, 1, 1], [], []>} : vector<16x4xbf16>, vector<4x128xbf16>, vector<16x128xf32> -> vector<16x128xf32>
    %39 = arith.addf %34, %38 : vector<16x128xf32>
    %c11 = arith.constant 11 : index
    %c0_29 = arith.constant 0 : index
    %c0_30 = arith.constant 0 : index
    %40 = vector.load %arg3[%c11, %c0_29, %c0_30] : memref<16x16x4xbf16, #tpu.memory_space<vmem>>, vector<1x16x4xbf16>
    %41 = vector.shape_cast %40 : vector<1x16x4xbf16> to vector<16x4xbf16>
    %42 = vector.extract_strided_slice %24 {offsets = [0, 10], sizes = [4, 128], strides = [1, 1]} : vector<4x256xbf16> to vector<4x128xbf16>
    %cst_31 = arith.constant dense<0.000000e+00> : vector<16x128xf32>
    %43 = tpu.matmul %41, %42, %cst_31 {dimension_numbers = #tpu.dot_dimension_numbers<[1], [0], [0], [1], [0, 0, 1, 1], [], []>} : vector<16x4xbf16>, vector<4x128xbf16>, vector<16x128xf32> -> vector<16x128xf32>
    %44 = arith.addf %39, %43 : vector<16x128xf32>
    %c0_32 = arith.constant 0 : index
    %c2_33 = arith.constant 2 : index
    %c0_34 = arith.constant 0 : index
    %c0_35 = arith.constant 0 : index
    %45 = vector.load %arg2[%c0_32, %c2_33, %c0_34, %c0_35] : memref<2x4x4x256xbf16, #tpu.memory_space<vmem>>, vector<1x1x4x256xbf16>
    %46 = vector.shape_cast %45 : vector<1x1x4x256xbf16> to vector<4x256xbf16>
    %c4 = arith.constant 4 : index
    %c0_36 = arith.constant 0 : index
    %c0_37 = arith.constant 0 : index
    %47 = vector.load %arg3[%c4, %c0_36, %c0_37] : memref<16x16x4xbf16, #tpu.memory_space<vmem>>, vector<1x16x4xbf16>
    %48 = vector.shape_cast %47 : vector<1x16x4xbf16> to vector<16x4xbf16>
    %49 = vector.extract_strided_slice %46 {offsets = [0, 0], sizes = [4, 128], strides = [1, 1]} : vector<4x256xbf16> to vector<4x128xbf16>
    %cst_38 = arith.constant dense<0.000000e+00> : vector<16x128xf32>
    %50 = tpu.matmul %48, %49, %cst_38 {dimension_numbers = #tpu.dot_dimension_numbers<[1], [0], [0], [1], [0, 0, 1, 1], [], []>} : vector<16x4xbf16>, vector<4x128xbf16>, vector<16x128xf32> -> vector<16x128xf32>
    %51 = arith.addf %44, %50 : vector<16x128xf32>
    %c6 = arith.constant 6 : index
    %c0_39 = arith.constant 0 : index
    %c0_40 = arith.constant 0 : index
    %52 = vector.load %arg3[%c6, %c0_39, %c0_40] : memref<16x16x4xbf16, #tpu.memory_space<vmem>>, vector<1x16x4xbf16>
    %53 = vector.shape_cast %52 : vector<1x16x4xbf16> to vector<16x4xbf16>
    %54 = vector.extract_strided_slice %46 {offsets = [0, 1], sizes = [4, 128], strides = [1, 1]} : vector<4x256xbf16> to vector<4x128xbf16>
    %cst_41 = arith.constant dense<0.000000e+00> : vector<16x128xf32>
    %55 = tpu.matmul %53, %54, %cst_41 {dimension_numbers = #tpu.dot_dimension_numbers<[1], [0], [0], [1], [0, 0, 1, 1], [], []>} : vector<16x4xbf16>, vector<4x128xbf16>, vector<16x128xf32> -> vector<16x128xf32>
    %56 = arith.addf %51, %55 : vector<16x128xf32>
    %c12 = arith.constant 12 : index
    %c0_42 = arith.constant 0 : index
    %c0_43 = arith.constant 0 : index
    %57 = vector.load %arg3[%c12, %c0_42, %c0_43] : memref<16x16x4xbf16, #tpu.memory_space<vmem>>, vector<1x16x4xbf16>
    %58 = vector.shape_cast %57 : vector<1x16x4xbf16> to vector<16x4xbf16>
    %59 = vector.extract_strided_slice %46 {offsets = [0, 9], sizes = [4, 128], strides = [1, 1]} : vector<4x256xbf16> to vector<4x128xbf16>
    %cst_44 = arith.constant dense<0.000000e+00> : vector<16x128xf32>
    %60 = tpu.matmul %58, %59, %cst_44 {dimension_numbers = #tpu.dot_dimension_numbers<[1], [0], [0], [1], [0, 0, 1, 1], [], []>} : vector<16x4xbf16>, vector<4x128xbf16>, vector<16x128xf32> -> vector<16x128xf32>
    %61 = arith.addf %56, %60 : vector<16x128xf32>
    %c14 = arith.constant 14 : index
    %c0_45 = arith.constant 0 : index
    %c0_46 = arith.constant 0 : index
    %62 = vector.load %arg3[%c14, %c0_45, %c0_46] : memref<16x16x4xbf16, #tpu.memory_space<vmem>>, vector<1x16x4xbf16>
    %63 = vector.shape_cast %62 : vector<1x16x4xbf16> to vector<16x4xbf16>
    %64 = vector.extract_strided_slice %46 {offsets = [0, 10], sizes = [4, 128], strides = [1, 1]} : vector<4x256xbf16> to vector<4x128xbf16>
    %cst_47 = arith.constant dense<0.000000e+00> : vector<16x128xf32>
    %65 = tpu.matmul %63, %64, %cst_47 {dimension_numbers = #tpu.dot_dimension_numbers<[1], [0], [0], [1], [0, 0, 1, 1], [], []>} : vector<16x4xbf16>, vector<4x128xbf16>, vector<16x128xf32> -> vector<16x128xf32>
    %66 = arith.addf %61, %65 : vector<16x128xf32>
    %c0_48 = arith.constant 0 : index
    %c3_49 = arith.constant 3 : index
    %c0_50 = arith.constant 0 : index
    %c0_51 = arith.constant 0 : index
    %67 = vector.load %arg2[%c0_48, %c3_49, %c0_50, %c0_51] : memref<2x4x4x256xbf16, #tpu.memory_space<vmem>>, vector<1x1x4x256xbf16>
    %68 = vector.shape_cast %67 : vector<1x1x4x256xbf16> to vector<4x256xbf16>
    %c5 = arith.constant 5 : index
    %c0_52 = arith.constant 0 : index
    %c0_53 = arith.constant 0 : index
    %69 = vector.load %arg3[%c5, %c0_52, %c0_53] : memref<16x16x4xbf16, #tpu.memory_space<vmem>>, vector<1x16x4xbf16>
    %70 = vector.shape_cast %69 : vector<1x16x4xbf16> to vector<16x4xbf16>
    %71 = vector.extract_strided_slice %68 {offsets = [0, 0], sizes = [4, 128], strides = [1, 1]} : vector<4x256xbf16> to vector<4x128xbf16>
    %cst_54 = arith.constant dense<0.000000e+00> : vector<16x128xf32>
    %72 = tpu.matmul %70, %71, %cst_54 {dimension_numbers = #tpu.dot_dimension_numbers<[1], [0], [0], [1], [0, 0, 1, 1], [], []>} : vector<16x4xbf16>, vector<4x128xbf16>, vector<16x128xf32> -> vector<16x128xf32>
    %73 = arith.addf %66, %72 : vector<16x128xf32>
    %c7 = arith.constant 7 : index
    %c0_55 = arith.constant 0 : index
    %c0_56 = arith.constant 0 : index
    %74 = vector.load %arg3[%c7, %c0_55, %c0_56] : memref<16x16x4xbf16, #tpu.memory_space<vmem>>, vector<1x16x4xbf16>
    %75 = vector.shape_cast %74 : vector<1x16x4xbf16> to vector<16x4xbf16>
    %76 = vector.extract_strided_slice %68 {offsets = [0, 1], sizes = [4, 128], strides = [1, 1]} : vector<4x256xbf16> to vector<4x128xbf16>
    %cst_57 = arith.constant dense<0.000000e+00> : vector<16x128xf32>
    %77 = tpu.matmul %75, %76, %cst_57 {dimension_numbers = #tpu.dot_dimension_numbers<[1], [0], [0], [1], [0, 0, 1, 1], [], []>} : vector<16x4xbf16>, vector<4x128xbf16>, vector<16x128xf32> -> vector<16x128xf32>
    %78 = arith.addf %73, %77 : vector<16x128xf32>
    %c13 = arith.constant 13 : index
    %c0_58 = arith.constant 0 : index
    %c0_59 = arith.constant 0 : index
    %79 = vector.load %arg3[%c13, %c0_58, %c0_59] : memref<16x16x4xbf16, #tpu.memory_space<vmem>>, vector<1x16x4xbf16>
    %80 = vector.shape_cast %79 : vector<1x16x4xbf16> to vector<16x4xbf16>
    %81 = vector.extract_strided_slice %68 {offsets = [0, 9], sizes = [4, 128], strides = [1, 1]} : vector<4x256xbf16> to vector<4x128xbf16>
    %cst_60 = arith.constant dense<0.000000e+00> : vector<16x128xf32>
    %82 = tpu.matmul %80, %81, %cst_60 {dimension_numbers = #tpu.dot_dimension_numbers<[1], [0], [0], [1], [0, 0, 1, 1], [], []>} : vector<16x4xbf16>, vector<4x128xbf16>, vector<16x128xf32> -> vector<16x128xf32>
    %83 = arith.addf %78, %82 : vector<16x128xf32>
    %c15 = arith.constant 15 : index
    %c0_61 = arith.constant 0 : index
    %c0_62 = arith.constant 0 : index
    %84 = vector.load %arg3[%c15, %c0_61, %c0_62] : memref<16x16x4xbf16, #tpu.memory_space<vmem>>, vector<1x16x4xbf16>
    %85 = vector.shape_cast %84 : vector<1x16x4xbf16> to vector<16x4xbf16>
    %86 = vector.extract_strided_slice %68 {offsets = [0, 10], sizes = [4, 128], strides = [1, 1]} : vector<4x256xbf16> to vector<4x128xbf16>
    %cst_63 = arith.constant dense<0.000000e+00> : vector<16x128xf32>
    %87 = tpu.matmul %85, %86, %cst_63 {dimension_numbers = #tpu.dot_dimension_numbers<[1], [0], [0], [1], [0, 0, 1, 1], [], []>} : vector<16x4xbf16>, vector<4x128xbf16>, vector<16x128xf32> -> vector<16x128xf32>
    %88 = arith.addf %83, %87 : vector<16x128xf32>
    %c0_64 = arith.constant 0 : index
    %c0_65 = arith.constant 0 : index
    %89 = vector.load %arg4[%c0_64, %c0_65] : memref<16x1xf32, #tpu.memory_space<vmem>>, vector<16x1xf32>
    %90 = vector.broadcast %89 : vector<16x1xf32> to vector<16x128xf32>
    %91 = arith.addf %88, %90 : vector<16x128xf32>
    %cst_66 = arith.constant 2.000000e-01 : f32
    %92 = vector.broadcast %cst_66 : f32 to vector<16x128xf32>
    %93 = arith.mulf %92, %91 : vector<16x128xf32>
    %94 = arith.maximumf %91, %93 : vector<16x128xf32>
    %95 = arith.truncf %94 : vector<16x128xf32> to vector<16x128xbf16>
    %c0_67 = arith.constant 0 : index
    %c0_68 = arith.constant 0 : index
    %c0_69 = arith.constant 0 : index
    %96 = vector.load %arg5[%c0_67, %c0_68, %c0_69] : memref<2x16x128xbf16, #tpu.memory_space<vmem>>, vector<1x16x128xbf16>
    %97 = vector.shape_cast %96 : vector<1x16x128xbf16> to vector<16x128xbf16>
    %98 = vector.shape_cast %95 : vector<16x128xbf16> to vector<1x16x128xbf16>
    tpu.vector_store %arg5[%c0_67, %c0_68, %c0_69], %98 {strides = array<i32>} : memref<2x16x128xbf16, #tpu.memory_space<vmem>>, vector<1x16x128xbf16>,
    %cst_70 = arith.constant 0.000000e+00 : f32
    %99 = vector.broadcast %cst_70 : f32 to vector<16x128xf32>
    %c1_71 = arith.constant 1 : index
    %c0_72 = arith.constant 0 : index
    %c0_73 = arith.constant 0 : index
    %c0_74 = arith.constant 0 : index
    %100 = vector.load %arg2[%c1_71, %c0_72, %c0_73, %c0_74] : memref<2x4x4x256xbf16, #tpu.memory_space<vmem>>, vector<1x1x4x256xbf16>
    %101 = vector.shape_cast %100 : vector<1x1x4x256xbf16> to vector<4x256xbf16>
    %c0_75 = arith.constant 0 : index
    %c0_76 = arith.constant 0 : index
    %c0_77 = arith.constant 0 : index
    %102 = vector.load %arg3[%c0_75, %c0_76, %c0_77] : memref<16x16x4xbf16, #tpu.memory_space<vmem>>, vector<1x16x4xbf16>
    %103 = vector.shape_cast %102 : vector<1x16x4xbf16> to vector<16x4xbf16>
    %104 = vector.extract_strided_slice %101 {offsets = [0, 0], sizes = [4, 128], strides = [1, 1]} : vector<4x256xbf16> to vector<4x128xbf16>
    %cst_78 = arith.constant dense<0.000000e+00> : vector<16x128xf32>
    %105 = tpu.matmul %103, %104, %cst_78 {dimension_numbers = #tpu.dot_dimension_numbers<[1], [0], [0], [1], [0, 0, 1, 1], [], []>} : vector<16x4xbf16>, vector<4x128xbf16>, vector<16x128xf32> -> vector<16x128xf32>
    %106 = arith.addf %99, %105 : vector<16x128xf32>
    %c2_79 = arith.constant 2 : index
    %c0_80 = arith.constant 0 : index
    %c0_81 = arith.constant 0 : index
    %107 = vector.load %arg3[%c2_79, %c0_80, %c0_81] : memref<16x16x4xbf16, #tpu.memory_space<vmem>>, vector<1x16x4xbf16>
    %108 = vector.shape_cast %107 : vector<1x16x4xbf16> to vector<16x4xbf16>
    %109 = vector.extract_strided_slice %101 {offsets = [0, 1], sizes = [4, 128], strides = [1, 1]} : vector<4x256xbf16> to vector<4x128xbf16>
    %cst_82 = arith.constant dense<0.000000e+00> : vector<16x128xf32>
    %110 = tpu.matmul %108, %109, %cst_82 {dimension_numbers = #tpu.dot_dimension_numbers<[1], [0], [0], [1], [0, 0, 1, 1], [], []>} : vector<16x4xbf16>, vector<4x128xbf16>, vector<16x128xf32> -> vector<16x128xf32>
    %111 = arith.addf %106, %110 : vector<16x128xf32>
    %c8_83 = arith.constant 8 : index
    %c0_84 = arith.constant 0 : index
    %c0_85 = arith.constant 0 : index
    %112 = vector.load %arg3[%c8_83, %c0_84, %c0_85] : memref<16x16x4xbf16, #tpu.memory_space<vmem>>, vector<1x16x4xbf16>
    %113 = vector.shape_cast %112 : vector<1x16x4xbf16> to vector<16x4xbf16>
    %114 = vector.extract_strided_slice %101 {offsets = [0, 9], sizes = [4, 128], strides = [1, 1]} : vector<4x256xbf16> to vector<4x128xbf16>
    %cst_86 = arith.constant dense<0.000000e+00> : vector<16x128xf32>
    %115 = tpu.matmul %113, %114, %cst_86 {dimension_numbers = #tpu.dot_dimension_numbers<[1], [0], [0], [1], [0, 0, 1, 1], [], []>} : vector<16x4xbf16>, vector<4x128xbf16>, vector<16x128xf32> -> vector<16x128xf32>
    %116 = arith.addf %111, %115 : vector<16x128xf32>
    %c10_87 = arith.constant 10 : index
    %c0_88 = arith.constant 0 : index
    %c0_89 = arith.constant 0 : index
    %117 = vector.load %arg3[%c10_87, %c0_88, %c0_89] : memref<16x16x4xbf16, #tpu.memory_space<vmem>>, vector<1x16x4xbf16>
    %118 = vector.shape_cast %117 : vector<1x16x4xbf16> to vector<16x4xbf16>
    %119 = vector.extract_strided_slice %101 {offsets = [0, 10], sizes = [4, 128], strides = [1, 1]} : vector<4x256xbf16> to vector<4x128xbf16>
    %cst_90 = arith.constant dense<0.000000e+00> : vector<16x128xf32>
    %120 = tpu.matmul %118, %119, %cst_90 {dimension_numbers = #tpu.dot_dimension_numbers<[1], [0], [0], [1], [0, 0, 1, 1], [], []>} : vector<16x4xbf16>, vector<4x128xbf16>, vector<16x128xf32> -> vector<16x128xf32>
    %121 = arith.addf %116, %120 : vector<16x128xf32>
    %c1_91 = arith.constant 1 : index
    %c1_92 = arith.constant 1 : index
    %c0_93 = arith.constant 0 : index
    %c0_94 = arith.constant 0 : index
    %122 = vector.load %arg2[%c1_91, %c1_92, %c0_93, %c0_94] : memref<2x4x4x256xbf16, #tpu.memory_space<vmem>>, vector<1x1x4x256xbf16>
    %123 = vector.shape_cast %122 : vector<1x1x4x256xbf16> to vector<4x256xbf16>
    %c1_95 = arith.constant 1 : index
    %c0_96 = arith.constant 0 : index
    %c0_97 = arith.constant 0 : index
    %124 = vector.load %arg3[%c1_95, %c0_96, %c0_97] : memref<16x16x4xbf16, #tpu.memory_space<vmem>>, vector<1x16x4xbf16>
    %125 = vector.shape_cast %124 : vector<1x16x4xbf16> to vector<16x4xbf16>
    %126 = vector.extract_strided_slice %123 {offsets = [0, 0], sizes = [4, 128], strides = [1, 1]} : vector<4x256xbf16> to vector<4x128xbf16>
    %cst_98 = arith.constant dense<0.000000e+00> : vector<16x128xf32>
    %127 = tpu.matmul %125, %126, %cst_98 {dimension_numbers = #tpu.dot_dimension_numbers<[1], [0], [0], [1], [0, 0, 1, 1], [], []>} : vector<16x4xbf16>, vector<4x128xbf16>, vector<16x128xf32> -> vector<16x128xf32>
    %128 = arith.addf %121, %127 : vector<16x128xf32>
    %c3_99 = arith.constant 3 : index
    %c0_100 = arith.constant 0 : index
    %c0_101 = arith.constant 0 : index
    %129 = vector.load %arg3[%c3_99, %c0_100, %c0_101] : memref<16x16x4xbf16, #tpu.memory_space<vmem>>, vector<1x16x4xbf16>
    %130 = vector.shape_cast %129 : vector<1x16x4xbf16> to vector<16x4xbf16>
    %131 = vector.extract_strided_slice %123 {offsets = [0, 1], sizes = [4, 128], strides = [1, 1]} : vector<4x256xbf16> to vector<4x128xbf16>
    %cst_102 = arith.constant dense<0.000000e+00> : vector<16x128xf32>
    %132 = tpu.matmul %130, %131, %cst_102 {dimension_numbers = #tpu.dot_dimension_numbers<[1], [0], [0], [1], [0, 0, 1, 1], [], []>} : vector<16x4xbf16>, vector<4x128xbf16>, vector<16x128xf32> -> vector<16x128xf32>
    %133 = arith.addf %128, %132 : vector<16x128xf32>
    %c9_103 = arith.constant 9 : index
    %c0_104 = arith.constant 0 : index
    %c0_105 = arith.constant 0 : index
    %134 = vector.load %arg3[%c9_103, %c0_104, %c0_105] : memref<16x16x4xbf16, #tpu.memory_space<vmem>>, vector<1x16x4xbf16>
    %135 = vector.shape_cast %134 : vector<1x16x4xbf16> to vector<16x4xbf16>
    %136 = vector.extract_strided_slice %123 {offsets = [0, 9], sizes = [4, 128], strides = [1, 1]} : vector<4x256xbf16> to vector<4x128xbf16>
    %cst_106 = arith.constant dense<0.000000e+00> : vector<16x128xf32>
    %137 = tpu.matmul %135, %136, %cst_106 {dimension_numbers = #tpu.dot_dimension_numbers<[1], [0], [0], [1], [0, 0, 1, 1], [], []>} : vector<16x4xbf16>, vector<4x128xbf16>, vector<16x128xf32> -> vector<16x128xf32>
    %138 = arith.addf %133, %137 : vector<16x128xf32>
    %c11_107 = arith.constant 11 : index
    %c0_108 = arith.constant 0 : index
    %c0_109 = arith.constant 0 : index
    %139 = vector.load %arg3[%c11_107, %c0_108, %c0_109] : memref<16x16x4xbf16, #tpu.memory_space<vmem>>, vector<1x16x4xbf16>
    %140 = vector.shape_cast %139 : vector<1x16x4xbf16> to vector<16x4xbf16>
    %141 = vector.extract_strided_slice %123 {offsets = [0, 10], sizes = [4, 128], strides = [1, 1]} : vector<4x256xbf16> to vector<4x128xbf16>
    %cst_110 = arith.constant dense<0.000000e+00> : vector<16x128xf32>
    %142 = tpu.matmul %140, %141, %cst_110 {dimension_numbers = #tpu.dot_dimension_numbers<[1], [0], [0], [1], [0, 0, 1, 1], [], []>} : vector<16x4xbf16>, vector<4x128xbf16>, vector<16x128xf32> -> vector<16x128xf32>
    %143 = arith.addf %138, %142 : vector<16x128xf32>
    %c1_111 = arith.constant 1 : index
    %c2_112 = arith.constant 2 : index
    %c0_113 = arith.constant 0 : index
    %c0_114 = arith.constant 0 : index
    %144 = vector.load %arg2[%c1_111, %c2_112, %c0_113, %c0_114] : memref<2x4x4x256xbf16, #tpu.memory_space<vmem>>, vector<1x1x4x256xbf16>
    %145 = vector.shape_cast %144 : vector<1x1x4x256xbf16> to vector<4x256xbf16>
    %c4_115 = arith.constant 4 : index
    %c0_116 = arith.constant 0 : index
    %c0_117 = arith.constant 0 : index
    %146 = vector.load %arg3[%c4_115, %c0_116, %c0_117] : memref<16x16x4xbf16, #tpu.memory_space<vmem>>, vector<1x16x4xbf16>
    %147 = vector.shape_cast %146 : vector<1x16x4xbf16> to vector<16x4xbf16>
    %148 = vector.extract_strided_slice %145 {offsets = [0, 0], sizes = [4, 128], strides = [1, 1]} : vector<4x256xbf16> to vector<4x128xbf16>
    %cst_118 = arith.constant dense<0.000000e+00> : vector<16x128xf32>
    %149 = tpu.matmul %147, %148, %cst_118 {dimension_numbers = #tpu.dot_dimension_numbers<[1], [0], [0], [1], [0, 0, 1, 1], [], []>} : vector<16x4xbf16>, vector<4x128xbf16>, vector<16x128xf32> -> vector<16x128xf32>
    %150 = arith.addf %143, %149 : vector<16x128xf32>
    %c6_119 = arith.constant 6 : index
    %c0_120 = arith.constant 0 : index
    %c0_121 = arith.constant 0 : index
    %151 = vector.load %arg3[%c6_119, %c0_120, %c0_121] : memref<16x16x4xbf16, #tpu.memory_space<vmem>>, vector<1x16x4xbf16>
    %152 = vector.shape_cast %151 : vector<1x16x4xbf16> to vector<16x4xbf16>
    %153 = vector.extract_strided_slice %145 {offsets = [0, 1], sizes = [4, 128], strides = [1, 1]} : vector<4x256xbf16> to vector<4x128xbf16>
    %cst_122 = arith.constant dense<0.000000e+00> : vector<16x128xf32>
    %154 = tpu.matmul %152, %153, %cst_122 {dimension_numbers = #tpu.dot_dimension_numbers<[1], [0], [0], [1], [0, 0, 1, 1], [], []>} : vector<16x4xbf16>, vector<4x128xbf16>, vector<16x128xf32> -> vector<16x128xf32>
    %155 = arith.addf %150, %154 : vector<16x128xf32>
    %c12_123 = arith.constant 12 : index
    %c0_124 = arith.constant 0 : index
    %c0_125 = arith.constant 0 : index
    %156 = vector.load %arg3[%c12_123, %c0_124, %c0_125] : memref<16x16x4xbf16, #tpu.memory_space<vmem>>, vector<1x16x4xbf16>
    %157 = vector.shape_cast %156 : vector<1x16x4xbf16> to vector<16x4xbf16>
    %158 = vector.extract_strided_slice %145 {offsets = [0, 9], sizes = [4, 128], strides = [1, 1]} : vector<4x256xbf16> to vector<4x128xbf16>
    %cst_126 = arith.constant dense<0.000000e+00> : vector<16x128xf32>
    %159 = tpu.matmul %157, %158, %cst_126 {dimension_numbers = #tpu.dot_dimension_numbers<[1], [0], [0], [1], [0, 0, 1, 1], [], []>} : vector<16x4xbf16>, vector<4x128xbf16>, vector<16x128xf32> -> vector<16x128xf32>
    %160 = arith.addf %155, %159 : vector<16x128xf32>
    %c14_127 = arith.constant 14 : index
    %c0_128 = arith.constant 0 : index
    %c0_129 = arith.constant 0 : index
    %161 = vector.load %arg3[%c14_127, %c0_128, %c0_129] : memref<16x16x4xbf16, #tpu.memory_space<vmem>>, vector<1x16x4xbf16>
    %162 = vector.shape_cast %161 : vector<1x16x4xbf16> to vector<16x4xbf16>
    %163 = vector.extract_strided_slice %145 {offsets = [0, 10], sizes = [4, 128], strides = [1, 1]} : vector<4x256xbf16> to vector<4x128xbf16>
    %cst_130 = arith.constant dense<0.000000e+00> : vector<16x128xf32>
    %164 = tpu.matmul %162, %163, %cst_130 {dimension_numbers = #tpu.dot_dimension_numbers<[1], [0], [0], [1], [0, 0, 1, 1], [], []>} : vector<16x4xbf16>, vector<4x128xbf16>, vector<16x128xf32> -> vector<16x128xf32>
    %165 = arith.addf %160, %164 : vector<16x128xf32>
    %c1_131 = arith.constant 1 : index
    %c3_132 = arith.constant 3 : index
    %c0_133 = arith.constant 0 : index
    %c0_134 = arith.constant 0 : index
    %166 = vector.load %arg2[%c1_131, %c3_132, %c0_133, %c0_134] : memref<2x4x4x256xbf16, #tpu.memory_space<vmem>>, vector<1x1x4x256xbf16>
    %167 = vector.shape_cast %166 : vector<1x1x4x256xbf16> to vector<4x256xbf16>
    %c5_135 = arith.constant 5 : index
    %c0_136 = arith.constant 0 : index
    %c0_137 = arith.constant 0 : index
    %168 = vector.load %arg3[%c5_135, %c0_136, %c0_137] : memref<16x16x4xbf16, #tpu.memory_space<vmem>>, vector<1x16x4xbf16>
    %169 = vector.shape_cast %168 : vector<1x16x4xbf16> to vector<16x4xbf16>
    %170 = vector.extract_strided_slice %167 {offsets = [0, 0], sizes = [4, 128], strides = [1, 1]} : vector<4x256xbf16> to vector<4x128xbf16>
    %cst_138 = arith.constant dense<0.000000e+00> : vector<16x128xf32>
    %171 = tpu.matmul %169, %170, %cst_138 {dimension_numbers = #tpu.dot_dimension_numbers<[1], [0], [0], [1], [0, 0, 1, 1], [], []>} : vector<16x4xbf16>, vector<4x128xbf16>, vector<16x128xf32> -> vector<16x128xf32>
    %172 = arith.addf %165, %171 : vector<16x128xf32>
    %c7_139 = arith.constant 7 : index
    %c0_140 = arith.constant 0 : index
    %c0_141 = arith.constant 0 : index
    %173 = vector.load %arg3[%c7_139, %c0_140, %c0_141] : memref<16x16x4xbf16, #tpu.memory_space<vmem>>, vector<1x16x4xbf16>
    %174 = vector.shape_cast %173 : vector<1x16x4xbf16> to vector<16x4xbf16>
    %175 = vector.extract_strided_slice %167 {offsets = [0, 1], sizes = [4, 128], strides = [1, 1]} : vector<4x256xbf16> to vector<4x128xbf16>
    %cst_142 = arith.constant dense<0.000000e+00> : vector<16x128xf32>
    %176 = tpu.matmul %174, %175, %cst_142 {dimension_numbers = #tpu.dot_dimension_numbers<[1], [0], [0], [1], [0, 0, 1, 1], [], []>} : vector<16x4xbf16>, vector<4x128xbf16>, vector<16x128xf32> -> vector<16x128xf32>
    %177 = arith.addf %172, %176 : vector<16x128xf32>
    %c13_143 = arith.constant 13 : index
    %c0_144 = arith.constant 0 : index
    %c0_145 = arith.constant 0 : index
    %178 = vector.load %arg3[%c13_143, %c0_144, %c0_145] : memref<16x16x4xbf16, #tpu.memory_space<vmem>>, vector<1x16x4xbf16>
    %179 = vector.shape_cast %178 : vector<1x16x4xbf16> to vector<16x4xbf16>
    %180 = vector.extract_strided_slice %167 {offsets = [0, 9], sizes = [4, 128], strides = [1, 1]} : vector<4x256xbf16> to vector<4x128xbf16>
    %cst_146 = arith.constant dense<0.000000e+00> : vector<16x128xf32>
    %181 = tpu.matmul %179, %180, %cst_146 {dimension_numbers = #tpu.dot_dimension_numbers<[1], [0], [0], [1], [0, 0, 1, 1], [], []>} : vector<16x4xbf16>, vector<4x128xbf16>, vector<16x128xf32> -> vector<16x128xf32>
    %182 = arith.addf %177, %181 : vector<16x128xf32>
    %c15_147 = arith.constant 15 : index
    %c0_148 = arith.constant 0 : index
    %c0_149 = arith.constant 0 : index
    %183 = vector.load %arg3[%c15_147, %c0_148, %c0_149] : memref<16x16x4xbf16, #tpu.memory_space<vmem>>, vector<1x16x4xbf16>
    %184 = vector.shape_cast %183 : vector<1x16x4xbf16> to vector<16x4xbf16>
    %185 = vector.extract_strided_slice %167 {offsets = [0, 10], sizes = [4, 128], strides = [1, 1]} : vector<4x256xbf16> to vector<4x128xbf16>
    %cst_150 = arith.constant dense<0.000000e+00> : vector<16x128xf32>
    %186 = tpu.matmul %184, %185, %cst_150 {dimension_numbers = #tpu.dot_dimension_numbers<[1], [0], [0], [1], [0, 0, 1, 1], [], []>} : vector<16x4xbf16>, vector<4x128xbf16>, vector<16x128xf32> -> vector<16x128xf32>
    %187 = arith.addf %182, %186 : vector<16x128xf32>
    %c0_151 = arith.constant 0 : index
    %c0_152 = arith.constant 0 : index
    %188 = vector.load %arg4[%c0_151, %c0_152] : memref<16x1xf32, #tpu.memory_space<vmem>>, vector<16x1xf32>
    %189 = vector.broadcast %188 : vector<16x1xf32> to vector<16x128xf32>
    %190 = arith.addf %187, %189 : vector<16x128xf32>
    %cst_153 = arith.constant 2.000000e-01 : f32
    %191 = vector.broadcast %cst_153 : f32 to vector<16x128xf32>
    %192 = arith.mulf %191, %190 : vector<16x128xf32>
    %193 = arith.maximumf %190, %192 : vector<16x128xf32>
    %194 = arith.truncf %193 : vector<16x128xf32> to vector<16x128xbf16>
    %c1_154 = arith.constant 1 : index
    %c0_155 = arith.constant 0 : index
    %c0_156 = arith.constant 0 : index
    %195 = vector.load %arg5[%c1_154, %c0_155, %c0_156] : memref<2x16x128xbf16, #tpu.memory_space<vmem>>, vector<1x16x128xbf16>
    %196 = vector.shape_cast %195 : vector<1x16x128xbf16> to vector<16x128xbf16>
    %197 = vector.shape_cast %194 : vector<16x128xbf16> to vector<1x16x128xbf16>
    tpu.vector_store %arg5[%c1_154, %c0_155, %c0_156], %197 {strides = array<i32>} : memref<2x16x128xbf16, #tpu.memory_space<vmem>>, vector<1x16x128xbf16>,
    return
  }
  func.func @transform_0(%arg0: i32, %arg1: i32) -> (i32, i32, i32, i32) {
    %c0_i32 = arith.constant 0 : i32
    %c0_i32_0 = arith.constant 0 : i32
    %c0_i32_1 = arith.constant 0 : i32
    %c0_i32_2 = arith.constant 0 : i32
    return %arg0, %c0_i32, %c0_i32_0, %c0_i32_1 : i32, i32, i32, i32
  }
  func.func @transform_1(%arg0: i32, %arg1: i32) -> (i32, i32, i32) {
    %c0_i32 = arith.constant 0 : i32
    %c0_i32_0 = arith.constant 0 : i32
    %c0_i32_1 = arith.constant 0 : i32
    return %c0_i32, %arg1, %c0_i32_0 : i32, i32, i32
  }
  func.func @transform_2(%arg0: i32, %arg1: i32) -> (i32, i32) {
    %c0_i32 = arith.constant 0 : i32
    %c0_i32_0 = arith.constant 0 : i32
    return %arg1, %c0_i32 : i32, i32
  }
  func.func @transform_3(%arg0: i32, %arg1: i32) -> (i32, i32, i32) {
    %c0_i32 = arith.constant 0 : i32
    %c0_i32_0 = arith.constant 0 : i32
    return %arg0, %arg1, %c0_i32 : i32, i32, i32
  }
}

</mosaic_0001>

<llo_original>
// kernel: tpu_custom_call.1
$region0: #{tpu_custom_call.1}
  #allocation0 [shape = 'u32[]', space=smem, size = 0x4, offset = 0x4, fixed_abs, tag = 'smem constant byte address 0x4 - core index']
  #allocation1 [shape = 'u32[144,128]{1,0:T(1,128)}', space=vmem, size = 0x12000, scoped, tag = 'internal scratch']
  %s0 = inlined_call_operand.vmem [shape: bf16[2,4,4,256], index: 0, kind: input, shape index: {}]
  %s1 = inlined_call_operand.vmem [shape: bf16[16,16,4], index: 1, kind: input, shape index: {}]
  %s2 = inlined_call_operand.vmem [shape: f32[16,1], index: 2, kind: input, shape index: {}]
  %s3 = inlined_call_operand.hbm [shape: bf16[2,16,128], index: 3, kind: output, shape index: {}]
  %s4 = sld [smem:[#allocation0]]
  $region22: #{tpu_custom_call.1} parent=0
    _
  %s6 = ssub.s32 1, %s4
  %s7 = scalar_select 0, %s6, %s4
  $region1: #{tpu_custom_call.1} parent=0
    #allocation2 [shape = 'u8[8192]{0}', space=vmem, size = 0x2000, scoped, tag = 'output window, operand 0, single buffered']
    #allocation3 [shape = 's32[1]{0}', space=sflag, size = 0x4, scoped, tag = 'scoped memory for tpu_custom_call.1']
    %8 = vsyncpa [#allocation3], 0
    // Predicated region
    $region2: #{tpu_custom_call.1} parent=1 // pred_check
      _
    $region3: #{tpu_custom_call.1} parent=1 // pred_check_branch
      %10 = sbr.rel (0) target = $region5
    $region4: #{tpu_custom_call.1} parent=1 // pred_region
      _
    $region5: #{tpu_custom_call.1} parent=1 // pred_fallthru
      _
    // Predicated region
    $region6: #{tpu_custom_call.1} parent=1 // pred_check
      _
    $region7: #{tpu_custom_call.1} parent=1 // pred_check_branch
      %12 = sbr.rel (0) target = $region9
    $region8: #{tpu_custom_call.1} parent=1 // pred_region
      _
    $region9: #{tpu_custom_call.1} parent=1 // pred_fallthru
      _
    // Predicated region
    $region10: #{tpu_custom_call.1} parent=1 // pred_check
      _
    $region11: #{tpu_custom_call.1} parent=1 // pred_check_branch
      %14 = sbr.rel (0) target = $region13
    $region12: #{tpu_custom_call.1} parent=1 // pred_region
      _
    $region13: #{tpu_custom_call.1} parent=1 // pred_fallthru
      _
    %v16 = vld [vmem:[%s0] sm:$0xf]
    %v17 = vld [vmem:[%s1] sm:$0xf]
    %v18 = vld [vmem:[%s1 + $0x4] sm:$0xf]
    %s19 = scalar_lea.vmem %s1, 16
    %v20 = vld [vmem:[%s19] sm:$0xf]
    %v21 = vld [vmem:[%s19 + $0x4] sm:$0xf]
    %v24 = vunpack.c.l.b16 %v20
    %v25 = vunpack.c.l.b16 %v21
    %v26 = vpack.c.b16 %v25, %v24
    %v29 = vunpack.c.l.s4 1983009808
    %v30 = vunpack.c.0.s8 %v29
    %v31 = vlaneseq
    %v32 = vshrl.u32 %v31, 7
    %v33 = vsub.s32 %v30, %v32
    %v34 = vrot.slane %v16, %v33
    %v35 = vcombine.high %v34, %v34
    %36 = vrot.lane.b32.xlu0 %v34, 127
    %v37 = vpop.permute.xlu0 %36
    %38 = vrot.lane.b32.xlu0 %v35, 127
    %v39 = vpop.permute.xlu0 %38
    %vm40 = vcmask 1039360
    %v41 = vsel %vm40, %v37, %v39
    %vm42 = vcmask 31744
    %v44 = vsel %vm42, %v26, 0
    %vm46 = vcmask 1041408
    %v48 = vsel %vm46, %v41, 0
    %50 = vmatprep.subr.bf16.mxu0 0
    %51 = vmatpush1.bf16.msra.mxu0 0
    %52 = vmatprep.subr.bf16.mxu0 0
    %53 = vmatpush1.bf16.msra.mxu0 0
    %54 = vmatprep.subr.bf16.mxu0 0
    %55 = vmatpush1.bf16.msra.mxu0 0
    %56 = vmatprep.subr.bf16.mxu0 0
    %57 = vmatpush1.bf16.msra.mxu0 0
    %58 = vmatprep.subr.bf16.mxu0 0
    %59 = vmatpush1.bf16.msra.mxu0 0
    %60 = vmatprep.subr.bf16.mxu0 0
    %61 = vmatpush1.bf16.msra.mxu0 0
    %62 = vmatprep.subr.bf16.mxu0 0
    %63 = vmatpush1.bf16.msra.mxu0 0
    %64 = vmatprep.subr.bf16.mxu0 0
    %65 = vmatpush1.bf16.msra.mxu0 %v48
    %66 = vmatprep.subr.bf16.mxu0 0
    %67 = vmatpush2.bf16.msra.mxu0 0
    %68 = vmatprep.subr.bf16.mxu0 0
    %69 = vmatpush2.bf16.msra.mxu0 0
    %70 = vmatprep.subr.bf16.mxu0 0
    %71 = vmatpush2.bf16.msra.mxu0 0
    %72 = vmatprep.subr.bf16.mxu0 0
    %73 = vmatpush2.bf16.msra.mxu0 0
    %74 = vmatprep.subr.bf16.mxu0 0
    %75 = vmatpush2.bf16.msra.mxu0 0
    %76 = vmatprep.subr.bf16.mxu0 0
    %77 = vmatpush2.bf16.msra.mxu0 0
    %78 = vmatprep.subr.bf16.mxu0 0
    %79 = vmatpush2.bf16.msra.mxu0 0
    %80 = vmatprep.subr.bf16.mxu0 0
    %81 = vmatpush2.bf16.msra.mxu0 0
    %82 = vmatprep.mubr.bf16.mxu0 0
    %83 = vmatmul.mubr.bf16.gmra.mxu0 %v44
    %v84 = vpop.f32.mrf.mxu0
    %v85 = vadd.f32 0.0, %v84
    %v86 = vpop.f32.mrf.mxu0
    %v87 = vpop.f32.mrf.mxu0
    %v88 = vadd.f32 0.0, %v87
    %v89 = vpop.f32.mrf.mxu0
    %90 = vdwg.mxu0
    %v93 = vunpack.c.l.b16 %v17
    %v94 = vunpack.c.l.b16 %v18
    %v95 = vpack.c.b16 %v94, %v93
    %v97 = vsel %vm42, %v95, 0
    %v100 = vsel %vm46, %v16, 0
    %102 = vmatprep.subr.bf16.mxu0 0
    %103 = vmatpush1.bf16.msra.mxu0 0
    %104 = vmatprep.subr.bf16.mxu0 0
    %105 = vmatpush1.bf16.msra.mxu0 0
    %106 = vmatprep.subr.bf16.mxu0 0
    %107 = vmatpush1.bf16.msra.mxu0 0
    %108 = vmatprep.subr.bf16.mxu0 0
    %109 = vmatpush1.bf16.msra.mxu0 0
    %110 = vmatprep.subr.bf16.mxu0 0
    %111 = vmatpush1.bf16.msra.mxu0 0
    %112 = vmatprep.subr.bf16.mxu0 0
    %113 = vmatpush1.bf16.msra.mxu0 0
    %114 = vmatprep.subr.bf16.mxu0 0
    %115 = vmatpush1.bf16.msra.mxu0 0
    %116 = vmatprep.subr.bf16.mxu0 0
    %117 = vmatpush1.bf16.msra.mxu0 %v100
    %118 = vmatprep.subr.bf16.mxu0 0
    %119 = vmatpush2.bf16.msra.mxu0 0
    %120 = vmatprep.subr.bf16.mxu0 0
    %121 = vmatpush2.bf16.msra.mxu0 0
    %122 = vmatprep.subr.bf16.mxu0 0
    %123 = vmatpush2.bf16.msra.mxu0 0
    %124 = vmatprep.subr.bf16.mxu0 0
    %125 = vmatpush2.bf16.msra.mxu0 0
    %126 = vmatprep.subr.bf16.mxu0 0
    %127 = vmatpush2.bf16.msra.mxu0 0
    %128 = vmatprep.subr.bf16.mxu0 0
    %129 = vmatpush2.bf16.msra.mxu0 0
    %130 = vmatprep.subr.bf16.mxu0 0
    %131 = vmatpush2.bf16.msra.mxu0 0
    %132 = vmatprep.subr.bf16.mxu0 0
    %133 = vmatpush2.bf16.msra.mxu0 0
    %134 = vmatprep.mubr.bf16.mxu0 0
    %135 = vmatmul.mubr.bf16.gmra.mxu0 %v97
    %v136 = vpop.f32.mrf.mxu0
    %v137 = vadd.f32 %v85, %v136
    %v138 = vpop.f32.mrf.mxu0
    %v139 = vpop.f32.mrf.mxu0
    %v140 = vadd.f32 %v88, %v139
    %v141 = vpop.f32.mrf.mxu0
    %142 = vdwg.mxu0
    %s143 = scalar_lea.vmem %s1, 64
    %v144 = vld [vmem:[%s143] sm:$0xf]
    %v145 = vld [vmem:[%s143 + $0x4] sm:$0xf]
    %v148 = vunpack.c.l.b16 %v144
    %v149 = vunpack.c.l.b16 %v145
    %v150 = vpack.c.b16 %v149, %v148
    %151 = vrot.lane.b32.xlu0 %v34, 119
    %v152 = vpop.permute.xlu0 %151
    %153 = vrot.lane.b32.xlu0 %v35, 119
    %v154 = vpop.permute.xlu0 %153
    %vm155 = vcmask 973824
    %v156 = vsel %vm155, %v152, %v154
    %v158 = vsel %vm42, %v150, 0
    %v161 = vsel %vm46, %v156, 0
    %163 = vmatprep.subr.bf16.mxu0 0
    %164 = vmatpush1.bf16.msra.mxu0 0
    %165 = vmatprep.subr.bf16.mxu0 0
    %166 = vmatpush1.bf16.msra.mxu0 0
    %167 = vmatprep.subr.bf16.mxu0 0
    %168 = vmatpush1.bf16.msra.mxu0 0
    %169 = vmatprep.subr.bf16.mxu0 0
    %170 = vmatpush1.bf16.msra.mxu0 0
    %171 = vmatprep.subr.bf16.mxu0 0
    %172 = vmatpush1.bf16.msra.mxu0 0
    %173 = vmatprep.subr.bf16.mxu0 0
    %174 = vmatpush1.bf16.msra.mxu0 0
    %175 = vmatprep.subr.bf16.mxu0 0
    %176 = vmatpush1.bf16.msra.mxu0 0
    %177 = vmatprep.subr.bf16.mxu0 0
    %178 = vmatpush1.bf16.msra.mxu0 %v161
    %179 = vmatprep.subr.bf16.mxu0 0
    %180 = vmatpush2.bf16.msra.mxu0 0
    %181 = vmatprep.subr.bf16.mxu0 0
    %182 = vmatpush2.bf16.msra.mxu0 0
    %183 = vmatprep.subr.bf16.mxu0 0
    %184 = vmatpush2.bf16.msra.mxu0 0
    %185 = vmatprep.subr.bf16.mxu0 0
    %186 = vmatpush2.bf16.msra.mxu0 0
    %187 = vmatprep.subr.bf16.mxu0 0
    %188 = vmatpush2.bf16.msra.mxu0 0
    %189 = vmatprep.subr.bf16.mxu0 0
    %190 = vmatpush2.bf16.msra.mxu0 0
    %191 = vmatprep.subr.bf16.mxu0 0
    %192 = vmatpush2.bf16.msra.mxu0 0
    %193 = vmatprep.subr.bf16.mxu0 0
    %194 = vmatpush2.bf16.msra.mxu0 0
    %195 = vmatprep.mubr.bf16.mxu0 0
    %196 = vmatmul.mubr.bf16.gmra.mxu0 %v158
    %v197 = vpop.f32.mrf.mxu0
    %v198 = vadd.f32 0.0, %v197
    %v199 = vpop.f32.mrf.mxu0
    %v200 = vpop.f32.mrf.mxu0
    %v201 = vadd.f32 0.0, %v200
    %v202 = vpop.f32.mrf.mxu0
    %203 = vdwg.mxu0
    %v204 = vadd.f32 %v137, %v198
    %v205 = vadd.f32 %v140, %v201
    %s206 = scalar_lea.vmem %s1, 80
    %v207 = vld [vmem:[%s206] sm:$0xf]
    %v208 = vld [vmem:[%s206 + $0x4] sm:$0xf]
    %v211 = vunpack.c.l.b16 %v207
    %v212 = vunpack.c.l.b16 %v208
    %v213 = vpack.c.b16 %v212, %v211
    %214 = vrot.lane.b32.xlu0 %v34, 118
    %v215 = vpop.permute.xlu0 %214
    %216 = vrot.lane.b32.xlu0 %v35, 118
    %v217 = vpop.permute.xlu0 %216
    %vm218 = vcmask 965632
    %v219 = vsel %vm218, %v215, %v217
    %v221 = vsel %vm42, %v213, 0
    %v224 = vsel %vm46, %v219, 0
    %226 = vmatprep.subr.bf16.mxu0 0
    %227 = vmatpush1.bf16.msra.mxu0 0
    %228 = vmatprep.subr.bf16.mxu0 0
    %229 = vmatpush1.bf16.msra.mxu0 0
    %230 = vmatprep.subr.bf16.mxu0 0
    %231 = vmatpush1.bf16.msra.mxu0 0
    %232 = vmatprep.subr.bf16.mxu0 0
    %233 = vmatpush1.bf16.msra.mxu0 0
    %234 = vmatprep.subr.bf16.mxu0 0
    %235 = vmatpush1.bf16.msra.mxu0 0
    %236 = vmatprep.subr.bf16.mxu0 0
    %237 = vmatpush1.bf16.msra.mxu0 0
    %238 = vmatprep.subr.bf16.mxu0 0
    %239 = vmatpush1.bf16.msra.mxu0 0
    %240 = vmatprep.subr.bf16.mxu0 0
    %241 = vmatpush1.bf16.msra.mxu0 %v224
    %242 = vmatprep.subr.bf16.mxu0 0
    %243 = vmatpush2.bf16.msra.mxu0 0
    %244 = vmatprep.subr.bf16.mxu0 0
    %245 = vmatpush2.bf16.msra.mxu0 0
    %246 = vmatprep.subr.bf16.mxu0 0
    %247 = vmatpush2.bf16.msra.mxu0 0
    %248 = vmatprep.subr.bf16.mxu0 0
    %249 = vmatpush2.bf16.msra.mxu0 0
    %250 = vmatprep.subr.bf16.mxu0 0
    %251 = vmatpush2.bf16.msra.mxu0 0
    %252 = vmatprep.subr.bf16.mxu0 0
    %253 = vmatpush2.bf16.msra.mxu0 0
    %254 = vmatprep.subr.bf16.mxu0 0
    %255 = vmatpush2.bf16.msra.mxu0 0
    %256 = vmatprep.subr.bf16.mxu0 0
    %257 = vmatpush2.bf16.msra.mxu0 0
    %258 = vmatprep.mubr.bf16.mxu0 0
    %259 = vmatmul.mubr.bf16.gmra.mxu0 %v221
    %v260 = vpop.f32.mrf.mxu0
    %v261 = vadd.f32 0.0, %v260
    %v262 = vpop.f32.mrf.mxu0
    %v263 = vpop.f32.mrf.mxu0
    %v264 = vadd.f32 0.0, %v263
    %v265 = vpop.f32.mrf.mxu0
    %266 = vdwg.mxu0
    %v267 = vadd.f32 %v204, %v261
    %v268 = vadd.f32 %v205, %v264
    %s269 = scalar_lea.vmem %s0, 4
    %v270 = vld [vmem:[%s269] sm:$0xf]
    %s271 = scalar_lea.vmem %s1, 8
    %v272 = vld [vmem:[%s271] sm:$0xf]
    %v273 = vld [vmem:[%s271 + $0x4] sm:$0xf]
    %v276 = vunpack.c.l.b16 %v272
    %v277 = vunpack.c.l.b16 %v273
    %v278 = vpack.c.b16 %v277, %v276
    %v280 = vsel %vm42, %v278, 0
    %v283 = vsel %vm46, %v270, 0
    %285 = vmatprep.subr.bf16.mxu0 0
    %286 = vmatpush1.bf16.msra.mxu0 0
    %287 = vmatprep.subr.bf16.mxu0 0
    %288 = vmatpush1.bf16.msra.mxu0 0
    %289 = vmatprep.subr.bf16.mxu0 0
    %290 = vmatpush1.bf16.msra.mxu0 0
    %291 = vmatprep.subr.bf16.mxu0 0
    %292 = vmatpush1.bf16.msra.mxu0 0
    %293 = vmatprep.subr.bf16.mxu0 0
    %294 = vmatpush1.bf16.msra.mxu0 0
    %295 = vmatprep.subr.bf16.mxu0 0
    %296 = vmatpush1.bf16.msra.mxu0 0
    %297 = vmatprep.subr.bf16.mxu0 0
    %298 = vmatpush1.bf16.msra.mxu0 0
    %299 = vmatprep.subr.bf16.mxu0 0
    %300 = vmatpush1.bf16.msra.mxu0 %v283
    %301 = vmatprep.subr.bf16.mxu0 0
    %302 = vmatpush2.bf16.msra.mxu0 0
    %303 = vmatprep.subr.bf16.mxu0 0
    %304 = vmatpush2.bf16.msra.mxu0 0
    %305 = vmatprep.subr.bf16.mxu0 0
    %306 = vmatpush2.bf16.msra.mxu0 0
    %307 = vmatprep.subr.bf16.mxu0 0
    %308 = vmatpush2.bf16.msra.mxu0 0
    %309 = vmatprep.subr.bf16.mxu0 0
    %310 = vmatpush2.bf16.msra.mxu0 0
    %311 = vmatprep.subr.bf16.mxu0 0
    %312 = vmatpush2.bf16.msra.mxu0 0
    %313 = vmatprep.subr.bf16.mxu0 0
    %314 = vmatpush2.bf16.msra.mxu0 0
    %315 = vmatprep.subr.bf16.mxu0 0
    %316 = vmatpush2.bf16.msra.mxu0 0
    %317 = vmatprep.mubr.bf16.mxu0 0
    %318 = vmatmul.mubr.bf16.gmra.mxu0 %v280
    %v319 = vpop.f32.mrf.mxu0
    %v320 = vadd.f32 0.0, %v319
    %v321 = vpop.f32.mrf.mxu0
    %v322 = vpop.f32.mrf.mxu0
    %v323 = vadd.f32 0.0, %v322
    %v324 = vpop.f32.mrf.mxu0
    %325 = vdwg.mxu0
    %v326 = vadd.f32 %v267, %v320
    %v327 = vadd.f32 %v268, %v323
    %s328 = scalar_lea.vmem %s1, 24
    %v329 = vld [vmem:[%s328] sm:$0xf]
    %v330 = vld [vmem:[%s328 + $0x4] sm:$0xf]
    %v333 = vunpack.c.l.b16 %v329
    %v334 = vunpack.c.l.b16 %v330
    %v335 = vpack.c.b16 %v334, %v333
    %v338 = vunpack.c.l.s4 1983009808
    %v339 = vunpack.c.0.s8 %v338
    %v340 = vlaneseq
    %v341 = vshrl.u32 %v340, 7
    %v342 = vsub.s32 %v339, %v341
    %v343 = vrot.slane %v270, %v342
    %v344 = vcombine.high %v343, %v343
    %345 = vrot.lane.b32.xlu0 %v343, 127
    %v346 = vpop.permute.xlu0 %345
    %347 = vrot.lane.b32.xlu0 %v344, 127
    %v348 = vpop.permute.xlu0 %347
    %v349 = vsel %vm40, %v346, %v348
    %v351 = vsel %vm42, %v335, 0
    %v354 = vsel %vm46, %v349, 0
    %356 = vmatprep.subr.bf16.mxu0 0
    %357 = vmatpush1.bf16.msra.mxu0 0
    %358 = vmatprep.subr.bf16.mxu0 0
    %359 = vmatpush1.bf16.msra.mxu0 0
    %360 = vmatprep.subr.bf16.mxu0 0
    %361 = vmatpush1.bf16.msra.mxu0 0
    %362 = vmatprep.subr.bf16.mxu0 0
    %363 = vmatpush1.bf16.msra.mxu0 0
    %364 = vmatprep.subr.bf16.mxu0 0
    %365 = vmatpush1.bf16.msra.mxu0 0
    %366 = vmatprep.subr.bf16.mxu0 0
    %367 = vmatpush1.bf16.msra.mxu0 0
    %368 = vmatprep.subr.bf16.mxu0 0
    %369 = vmatpush1.bf16.msra.mxu0 0
    %370 = vmatprep.subr.bf16.mxu0 0
    %371 = vmatpush1.bf16.msra.mxu0 %v354
    %372 = vmatprep.subr.bf16.mxu0 0
    %373 = vmatpush2.bf16.msra.mxu0 0
    %374 = vmatprep.subr.bf16.mxu0 0
    %375 = vmatpush2.bf16.msra.mxu0 0
    %376 = vmatprep.subr.bf16.mxu0 0
    %377 = vmatpush2.bf16.msra.mxu0 0
    %378 = vmatprep.subr.bf16.mxu0 0
    %379 = vmatpush2.bf16.msra.mxu0 0
    %380 = vmatprep.subr.bf16.mxu0 0
    %381 = vmatpush2.bf16.msra.mxu0 0
    %382 = vmatprep.subr.bf16.mxu0 0
    %383 = vmatpush2.bf16.msra.mxu0 0
    %384 = vmatprep.subr.bf16.mxu0 0
    %385 = vmatpush2.bf16.msra.mxu0 0
    %386 = vmatprep.subr.bf16.mxu0 0
    %387 = vmatpush2.bf16.msra.mxu0 0
    %388 = vmatprep.mubr.bf16.mxu0 0
    %389 = vmatmul.mubr.bf16.gmra.mxu0 %v351
    %v390 = vpop.f32.mrf.mxu0
    %v391 = vadd.f32 0.0, %v390
    %v392 = vpop.f32.mrf.mxu0
    %v393 = vpop.f32.mrf.mxu0
    %v394 = vadd.f32 0.0, %v393
    %v395 = vpop.f32.mrf.mxu0
    %396 = vdwg.mxu0
    %v397 = vadd.f32 %v326, %v391
    %v398 = vadd.f32 %v327, %v394
    %s399 = scalar_lea.vmem %s1, 72
    %v400 = vld [vmem:[%s399] sm:$0xf]
    %v401 = vld [vmem:[%s399 + $0x4] sm:$0xf]
    %v404 = vunpack.c.l.b16 %v400
    %v405 = vunpack.c.l.b16 %v401
    %v406 = vpack.c.b16 %v405, %v404
    %407 = vrot.lane.b32.xlu0 %v343, 119
    %v408 = vpop.permute.xlu0 %407
    %409 = vrot.lane.b32.xlu0 %v344, 119
    %v410 = vpop.permute.xlu0 %409
    %v411 = vsel %vm155, %v408, %v410
    %v413 = vsel %vm42, %v406, 0
    %v416 = vsel %vm46, %v411, 0
    %418 = vmatprep.subr.bf16.mxu0 0
    %419 = vmatpush1.bf16.msra.mxu0 0
    %420 = vmatprep.subr.bf16.mxu0 0
    %421 = vmatpush1.bf16.msra.mxu0 0
    %422 = vmatprep.subr.bf16.mxu0 0
    %423 = vmatpush1.bf16.msra.mxu0 0
    %424 = vmatprep.subr.bf16.mxu0 0
    %425 = vmatpush1.bf16.msra.mxu0 0
    %426 = vmatprep.subr.bf16.mxu0 0
    %427 = vmatpush1.bf16.msra.mxu0 0
    %428 = vmatprep.subr.bf16.mxu0 0
    %429 = vmatpush1.bf16.msra.mxu0 0
    %430 = vmatprep.subr.bf16.mxu0 0
    %431 = vmatpush1.bf16.msra.mxu0 0
    %432 = vmatprep.subr.bf16.mxu0 0
    %433 = vmatpush1.bf16.msra.mxu0 %v416
    %434 = vmatprep.subr.bf16.mxu0 0
    %435 = vmatpush2.bf16.msra.mxu0 0
    %436 = vmatprep.subr.bf16.mxu0 0
    %437 = vmatpush2.bf16.msra.mxu0 0
    %438 = vmatprep.subr.bf16.mxu0 0
    %439 = vmatpush2.bf16.msra.mxu0 0
    %440 = vmatprep.subr.bf16.mxu0 0
    %441 = vmatpush2.bf16.msra.mxu0 0
    %442 = vmatprep.subr.bf16.mxu0 0
    %443 = vmatpush2.bf16.msra.mxu0 0
    %444 = vmatprep.subr.bf16.mxu0 0
    %445 = vmatpush2.bf16.msra.mxu0 0
    %446 = vmatprep.subr.bf16.mxu0 0
    %447 = vmatpush2.bf16.msra.mxu0 0
    %448 = vmatprep.subr.bf16.mxu0 0
    %449 = vmatpush2.bf16.msra.mxu0 0
    %450 = vmatprep.mubr.bf16.mxu0 0
    %451 = vmatmul.mubr.bf16.gmra.mxu0 %v413
    %v452 = vpop.f32.mrf.mxu0
    %v453 = vadd.f32 0.0, %v452
    %v454 = vpop.f32.mrf.mxu0
    %v455 = vpop.f32.mrf.mxu0
    %v456 = vadd.f32 0.0, %v455
    %v457 = vpop.f32.mrf.mxu0
    %458 = vdwg.mxu0
    %v459 = vadd.f32 %v397, %v453
    %v460 = vadd.f32 %v398, %v456
    %s461 = scalar_lea.vmem %s1, 88
    %v462 = vld [vmem:[%s461] sm:$0xf]
    %v463 = vld [vmem:[%s461 + $0x4] sm:$0xf]
    %v466 = vunpack.c.l.b16 %v462
    %v467 = vunpack.c.l.b16 %v463
    %v468 = vpack.c.b16 %v467, %v466
    %469 = vrot.lane.b32.xlu0 %v343, 118
    %v470 = vpop.permute.xlu0 %469
    %471 = vrot.lane.b32.xlu0 %v344, 118
    %v472 = vpop.permute.xlu0 %471
    %v473 = vsel %vm218, %v470, %v472
    %v475 = vsel %vm42, %v468, 0
    %v478 = vsel %vm46, %v473, 0
    %480 = vmatprep.subr.bf16.mxu0 0
    %481 = vmatpush1.bf16.msra.mxu0 0
    %482 = vmatprep.subr.bf16.mxu0 0
    %483 = vmatpush1.bf16.msra.mxu0 0
    %484 = vmatprep.subr.bf16.mxu0 0
    %485 = vmatpush1.bf16.msra.mxu0 0
    %486 = vmatprep.subr.bf16.mxu0 0
    %487 = vmatpush1.bf16.msra.mxu0 0
    %488 = vmatprep.subr.bf16.mxu0 0
    %489 = vmatpush1.bf16.msra.mxu0 0
    %490 = vmatprep.subr.bf16.mxu0 0
    %491 = vmatpush1.bf16.msra.mxu0 0
    %492 = vmatprep.subr.bf16.mxu0 0
    %493 = vmatpush1.bf16.msra.mxu0 0
    %494 = vmatprep.subr.bf16.mxu0 0
    %495 = vmatpush1.bf16.msra.mxu0 %v478
    %496 = vmatprep.subr.bf16.mxu0 0
    %497 = vmatpush2.bf16.msra.mxu0 0
    %498 = vmatprep.subr.bf16.mxu0 0
    %499 = vmatpush2.bf16.msra.mxu0 0
    %500 = vmatprep.subr.bf16.mxu0 0
    %501 = vmatpush2.bf16.msra.mxu0 0
    %502 = vmatprep.subr.bf16.mxu0 0
    %503 = vmatpush2.bf16.msra.mxu0 0
    %504 = vmatprep.subr.bf16.mxu0 0
    %505 = vmatpush2.bf16.msra.mxu0 0
    %506 = vmatprep.subr.bf16.mxu0 0
    %507 = vmatpush2.bf16.msra.mxu0 0
    %508 = vmatprep.subr.bf16.mxu0 0
    %509 = vmatpush2.bf16.msra.mxu0 0
    %510 = vmatprep.subr.bf16.mxu0 0
    %511 = vmatpush2.bf16.msra.mxu0 0
    %512 = vmatprep.mubr.bf16.mxu0 0
    %513 = vmatmul.mubr.bf16.gmra.mxu0 %v475
    %v514 = vpop.f32.mrf.mxu0
    %v515 = vadd.f32 0.0, %v514
    %v516 = vpop.f32.mrf.mxu0
    %v517 = vpop.f32.mrf.mxu0
    %v518 = vadd.f32 0.0, %v517
    %v519 = vpop.f32.mrf.mxu0
    %520 = vdwg.mxu0
    %v521 = vadd.f32 %v459, %v515
    %v522 = vadd.f32 %v460, %v518
    %s523 = scalar_lea.vmem %s0, 8
    %v524 = vld [vmem:[%s523] sm:$0xf]
    %s525 = scalar_lea.vmem %s1, 32
    %v526 = vld [vmem:[%s525] sm:$0xf]
    %v527 = vld [vmem:[%s525 + $0x4] sm:$0xf]
    %v530 = vunpack.c.l.b16 %v526
    %v531 = vunpack.c.l.b16 %v527
    %v532 = vpack.c.b16 %v531, %v530
    %v534 = vsel %vm42, %v532, 0
    %v537 = vsel %vm46, %v524, 0
    %539 = vmatprep.subr.bf16.mxu0 0
    %540 = vmatpush1.bf16.msra.mxu0 0
    %541 = vmatprep.subr.bf16.mxu0 0
    %542 = vmatpush1.bf16.msra.mxu0 0
    %543 = vmatprep.subr.bf16.mxu0 0
    %544 = vmatpush1.bf16.msra.mxu0 0
    %545 = vmatprep.subr.bf16.mxu0 0
    %546 = vmatpush1.bf16.msra.mxu0 0
    %547 = vmatprep.subr.bf16.mxu0 0
    %548 = vmatpush1.bf16.msra.mxu0 0
    %549 = vmatprep.subr.bf16.mxu0 0
    %550 = vmatpush1.bf16.msra.mxu0 0
    %551 = vmatprep.subr.bf16.mxu0 0
    %552 = vmatpush1.bf16.msra.mxu0 0
    %553 = vmatprep.subr.bf16.mxu0 0
    %554 = vmatpush1.bf16.msra.mxu0 %v537
    %555 = vmatprep.subr.bf16.mxu0 0
    %556 = vmatpush2.bf16.msra.mxu0 0
    %557 = vmatprep.subr.bf16.mxu0 0
    %558 = vmatpush2.bf16.msra.mxu0 0
    %559 = vmatprep.subr.bf16.mxu0 0
    %560 = vmatpush2.bf16.msra.mxu0 0
    %561 = vmatprep.subr.bf16.mxu0 0
    %562 = vmatpush2.bf16.msra.mxu0 0
    %563 = vmatprep.subr.bf16.mxu0 0
    %564 = vmatpush2.bf16.msra.mxu0 0
    %565 = vmatprep.subr.bf16.mxu0 0
    %566 = vmatpush2.bf16.msra.mxu0 0
    %567 = vmatprep.subr.bf16.mxu0 0
    %568 = vmatpush2.bf16.msra.mxu0 0
    %569 = vmatprep.subr.bf16.mxu0 0
    %570 = vmatpush2.bf16.msra.mxu0 0
    %571 = vmatprep.mubr.bf16.mxu0 0
    %572 = vmatmul.mubr.bf16.gmra.mxu0 %v534
    %v573 = vpop.f32.mrf.mxu0
    %v574 = vadd.f32 0.0, %v573
    %v575 = vpop.f32.mrf.mxu0
    %v576 = vpop.f32.mrf.mxu0
    %v577 = vadd.f32 0.0, %v576
    %v578 = vpop.f32.mrf.mxu0
    %579 = vdwg.mxu0
    %v580 = vadd.f32 %v521, %v574
    %v581 = vadd.f32 %v522, %v577
    %s582 = scalar_lea.vmem %s1, 48
    %v583 = vld [vmem:[%s582] sm:$0xf]
    %v584 = vld [vmem:[%s582 + $0x4] sm:$0xf]
    %v587 = vunpack.c.l.b16 %v583
    %v588 = vunpack.c.l.b16 %v584
    %v589 = vpack.c.b16 %v588, %v587
    %v592 = vunpack.c.l.s4 1983009808
    %v593 = vunpack.c.0.s8 %v592
    %v594 = vlaneseq
    %v595 = vshrl.u32 %v594, 7
    %v596 = vsub.s32 %v593, %v595
    %v597 = vrot.slane %v524, %v596
    %v598 = vcombine.high %v597, %v597
    %599 = vrot.lane.b32.xlu0 %v597, 127
    %v600 = vpop.permute.xlu0 %599
    %601 = vrot.lane.b32.xlu0 %v598, 127
    %v602 = vpop.permute.xlu0 %601
    %v603 = vsel %vm40, %v600, %v602
    %v605 = vsel %vm42, %v589, 0
    %v608 = vsel %vm46, %v603, 0
    %610 = vmatprep.subr.bf16.mxu0 0
    %611 = vmatpush1.bf16.msra.mxu0 0
    %612 = vmatprep.subr.bf16.mxu0 0
    %613 = vmatpush1.bf16.msra.mxu0 0
    %614 = vmatprep.subr.bf16.mxu0 0
    %615 = vmatpush1.bf16.msra.mxu0 0
    %616 = vmatprep.subr.bf16.mxu0 0
    %617 = vmatpush1.bf16.msra.mxu0 0
    %618 = vmatprep.subr.bf16.mxu0 0
    %619 = vmatpush1.bf16.msra.mxu0 0
    %620 = vmatprep.subr.bf16.mxu0 0
    %621 = vmatpush1.bf16.msra.mxu0 0
    %622 = vmatprep.subr.bf16.mxu0 0
    %623 = vmatpush1.bf16.msra.mxu0 0
    %624 = vmatprep.subr.bf16.mxu0 0
    %625 = vmatpush1.bf16.msra.mxu0 %v608
    %626 = vmatprep.subr.bf16.mxu0 0
    %627 = vmatpush2.bf16.msra.mxu0 0
    %628 = vmatprep.subr.bf16.mxu0 0
    %629 = vmatpush2.bf16.msra.mxu0 0
    %630 = vmatprep.subr.bf16.mxu0 0
    %631 = vmatpush2.bf16.msra.mxu0 0
    %632 = vmatprep.subr.bf16.mxu0 0
    %633 = vmatpush2.bf16.msra.mxu0 0
    %634 = vmatprep.subr.bf16.mxu0 0
    %635 = vmatpush2.bf16.msra.mxu0 0
    %636 = vmatprep.subr.bf16.mxu0 0
    %637 = vmatpush2.bf16.msra.mxu0 0
    %638 = vmatprep.subr.bf16.mxu0 0
    %639 = vmatpush2.bf16.msra.mxu0 0
    %640 = vmatprep.subr.bf16.mxu0 0
    %641 = vmatpush2.bf16.msra.mxu0 0
    %642 = vmatprep.mubr.bf16.mxu0 0
    %643 = vmatmul.mubr.bf16.gmra.mxu0 %v605
    %v644 = vpop.f32.mrf.mxu0
    %v645 = vadd.f32 0.0, %v644
    %v646 = vpop.f32.mrf.mxu0
    %v647 = vpop.f32.mrf.mxu0
    %v648 = vadd.f32 0.0, %v647
    %v649 = vpop.f32.mrf.mxu0
    %650 = vdwg.mxu0
    %v651 = vadd.f32 %v580, %v645
    %v652 = vadd.f32 %v581, %v648
    %s653 = scalar_lea.vmem %s1, 96
    %v654 = vld [vmem:[%s653] sm:$0xf]
    %v655 = vld [vmem:[%s653 + $0x4] sm:$0xf]
    %v658 = vunpack.c.l.b16 %v654
    %v659 = vunpack.c.l.b16 %v655
    %v660 = vpack.c.b16 %v659, %v658
    %661 = vrot.lane.b32.xlu0 %v597, 119
    %v662 = vpop.permute.xlu0 %661
    %663 = vrot.lane.b32.xlu0 %v598, 119
    %v664 = vpop.permute.xlu0 %663
    %v665 = vsel %vm155, %v662, %v664
    %v667 = vsel %vm42, %v660, 0
    %v670 = vsel %vm46, %v665, 0
    %672 = vmatprep.subr.bf16.mxu0 0
    %673 = vmatpush1.bf16.msra.mxu0 0
    %674 = vmatprep.subr.bf16.mxu0 0
    %675 = vmatpush1.bf16.msra.mxu0 0
    %676 = vmatprep.subr.bf16.mxu0 0
    %677 = vmatpush1.bf16.msra.mxu0 0
    %678 = vmatprep.subr.bf16.mxu0 0
    %679 = vmatpush1.bf16.msra.mxu0 0
    %680 = vmatprep.subr.bf16.mxu0 0
    %681 = vmatpush1.bf16.msra.mxu0 0
    %682 = vmatprep.subr.bf16.mxu0 0
    %683 = vmatpush1.bf16.msra.mxu0 0
    %684 = vmatprep.subr.bf16.mxu0 0
    %685 = vmatpush1.bf16.msra.mxu0 0
    %686 = vmatprep.subr.bf16.mxu0 0
    %687 = vmatpush1.bf16.msra.mxu0 %v670
    %688 = vmatprep.subr.bf16.mxu0 0
    %689 = vmatpush2.bf16.msra.mxu0 0
    %690 = vmatprep.subr.bf16.mxu0 0
    %691 = vmatpush2.bf16.msra.mxu0 0
    %692 = vmatprep.subr.bf16.mxu0 0
    %693 = vmatpush2.bf16.msra.mxu0 0
    %694 = vmatprep.subr.bf16.mxu0 0
    %695 = vmatpush2.bf16.msra.mxu0 0
    %696 = vmatprep.subr.bf16.mxu0 0
    %697 = vmatpush2.bf16.msra.mxu0 0
    %698 = vmatprep.subr.bf16.mxu0 0
    %699 = vmatpush2.bf16.msra.mxu0 0
    %700 = vmatprep.subr.bf16.mxu0 0
    %701 = vmatpush2.bf16.msra.mxu0 0
    %702 = vmatprep.subr.bf16.mxu0 0
    %703 = vmatpush2.bf16.msra.mxu0 0
    %704 = vmatprep.mubr.bf16.mxu0 0
    %705 = vmatmul.mubr.bf16.gmra.mxu0 %v667
    %v706 = vpop.f32.mrf.mxu0
    %v707 = vadd.f32 0.0, %v706
    %v708 = vpop.f32.mrf.mxu0
    %v709 = vpop.f32.mrf.mxu0
    %v710 = vadd.f32 0.0, %v709
    %v711 = vpop.f32.mrf.mxu0
    %712 = vdwg.mxu0
    %v713 = vadd.f32 %v651, %v707
    %v714 = vadd.f32 %v652, %v710
    %s715 = scalar_lea.vmem %s1, 112
    %v716 = vld [vmem:[%s715] sm:$0xf]
    %v717 = vld [vmem:[%s715 + $0x4] sm:$0xf]
    %v720 = vunpack.c.l.b16 %v716
    %v721 = vunpack.c.l.b16 %v717
    %v722 = vpack.c.b16 %v721, %v720
    %723 = vrot.lane.b32.xlu0 %v597, 118
    %v724 = vpop.permute.xlu0 %723
    %725 = vrot.lane.b32.xlu0 %v598, 118
    %v726 = vpop.permute.xlu0 %725
    %v727 = vsel %vm218, %v724, %v726
    %v729 = vsel %vm42, %v722, 0
    %v732 = vsel %vm46, %v727, 0
    %734 = vmatprep.subr.bf16.mxu0 0
    %735 = vmatpush1.bf16.msra.mxu0 0
    %736 = vmatprep.subr.bf16.mxu0 0
    %737 = vmatpush1.bf16.msra.mxu0 0
    %738 = vmatprep.subr.bf16.mxu0 0
    %739 = vmatpush1.bf16.msra.mxu0 0
    %740 = vmatprep.subr.bf16.mxu0 0
    %741 = vmatpush1.bf16.msra.mxu0 0
    %742 = vmatprep.subr.bf16.mxu0 0
    %743 = vmatpush1.bf16.msra.mxu0 0
    %744 = vmatprep.subr.bf16.mxu0 0
    %745 = vmatpush1.bf16.msra.mxu0 0
    %746 = vmatprep.subr.bf16.mxu0 0
    %747 = vmatpush1.bf16.msra.mxu0 0
    %748 = vmatprep.subr.bf16.mxu0 0
    %749 = vmatpush1.bf16.msra.mxu0 %v732
    %750 = vmatprep.subr.bf16.mxu0 0
    %751 = vmatpush2.bf16.msra.mxu0 0
    %752 = vmatprep.subr.bf16.mxu0 0
    %753 = vmatpush2.bf16.msra.mxu0 0
    %754 = vmatprep.subr.bf16.mxu0 0
    %755 = vmatpush2.bf16.msra.mxu0 0
    %756 = vmatprep.subr.bf16.mxu0 0
    %757 = vmatpush2.bf16.msra.mxu0 0
    %758 = vmatprep.subr.bf16.mxu0 0
    %759 = vmatpush2.bf16.msra.mxu0 0
    %760 = vmatprep.subr.bf16.mxu0 0
    %761 = vmatpush2.bf16.msra.mxu0 0
    %762 = vmatprep.subr.bf16.mxu0 0
    %763 = vmatpush2.bf16.msra.mxu0 0
    %764 = vmatprep.subr.bf16.mxu0 0
    %765 = vmatpush2.bf16.msra.mxu0 0
    %766 = vmatprep.mubr.bf16.mxu0 0
    %767 = vmatmul.mubr.bf16.gmra.mxu0 %v729
    %v768 = vpop.f32.mrf.mxu0
    %v769 = vadd.f32 0.0, %v768
    %v770 = vpop.f32.mrf.mxu0
    %v771 = vpop.f32.mrf.mxu0
    %v772 = vadd.f32 0.0, %v771
    %v773 = vpop.f32.mrf.mxu0
    %774 = vdwg.mxu0
    %v775 = vadd.f32 %v713, %v769
    %v776 = vadd.f32 %v714, %v772
    %s777 = scalar_lea.vmem %s0, 12
    %v778 = vld [vmem:[%s777] sm:$0xf]
    %s779 = scalar_lea.vmem %s1, 40
    %v780 = vld [vmem:[%s779] sm:$0xf]
    %v781 = vld [vmem:[%s779 + $0x4] sm:$0xf]
    %v784 = vunpack.c.l.b16 %v780
    %v785 = vunpack.c.l.b16 %v781
    %v786 = vpack.c.b16 %v785, %v784
    %v788 = vsel %vm42, %v786, 0
    %v791 = vsel %vm46, %v778, 0
    %793 = vmatprep.subr.bf16.mxu0 0
    %794 = vmatpush1.bf16.msra.mxu0 0
    %795 = vmatprep.subr.bf16.mxu0 0
    %796 = vmatpush1.bf16.msra.mxu0 0
    %797 = vmatprep.subr.bf16.mxu0 0
    %798 = vmatpush1.bf16.msra.mxu0 0
    %799 = vmatprep.subr.bf16.mxu0 0
    %800 = vmatpush1.bf16.msra.mxu0 0
    %801 = vmatprep.subr.bf16.mxu0 0
    %802 = vmatpush1.bf16.msra.mxu0 0
    %803 = vmatprep.subr.bf16.mxu0 0
    %804 = vmatpush1.bf16.msra.mxu0 0
    %805 = vmatprep.subr.bf16.mxu0 0
    %806 = vmatpush1.bf16.msra.mxu0 0
    %807 = vmatprep.subr.bf16.mxu0 0
    %808 = vmatpush1.bf16.msra.mxu0 %v791
    %809 = vmatprep.subr.bf16.mxu0 0
    %810 = vmatpush2.bf16.msra.mxu0 0
    %811 = vmatprep.subr.bf16.mxu0 0
    %812 = vmatpush2.bf16.msra.mxu0 0
    %813 = vmatprep.subr.bf16.mxu0 0
    %814 = vmatpush2.bf16.msra.mxu0 0
    %815 = vmatprep.subr.bf16.mxu0 0
    %816 = vmatpush2.bf16.msra.mxu0 0
    %817 = vmatprep.subr.bf16.mxu0 0
    %818 = vmatpush2.bf16.msra.mxu0 0
    %819 = vmatprep.subr.bf16.mxu0 0
    %820 = vmatpush2.bf16.msra.mxu0 0
    %821 = vmatprep.subr.bf16.mxu0 0
    %822 = vmatpush2.bf16.msra.mxu0 0
    %823 = vmatprep.subr.bf16.mxu0 0
    %824 = vmatpush2.bf16.msra.mxu0 0
    %825 = vmatprep.mubr.bf16.mxu0 0
    %826 = vmatmul.mubr.bf16.gmra.mxu0 %v788
    %v827 = vpop.f32.mrf.mxu0
    %v828 = vadd.f32 0.0, %v827
    %v829 = vpop.f32.mrf.mxu0
    %v830 = vpop.f32.mrf.mxu0
    %v831 = vadd.f32 0.0, %v830
    %v832 = vpop.f32.mrf.mxu0
    %833 = vdwg.mxu0
    %v834 = vadd.f32 %v775, %v828
    %v835 = vadd.f32 %v776, %v831
    %s836 = scalar_lea.vmem %s1, 56
    %v837 = vld [vmem:[%s836] sm:$0xf]
    %v838 = vld [vmem:[%s836 + $0x4] sm:$0xf]
    %v841 = vunpack.c.l.b16 %v837
    %v842 = vunpack.c.l.b16 %v838
    %v843 = vpack.c.b16 %v842, %v841
    %v846 = vunpack.c.l.s4 1983009808
    %v847 = vunpack.c.0.s8 %v846
    %v848 = vlaneseq
    %v849 = vshrl.u32 %v848, 7
    %v850 = vsub.s32 %v847, %v849
    %v851 = vrot.slane %v778, %v850
    %v852 = vcombine.high %v851, %v851
    %853 = vrot.lane.b32.xlu0 %v851, 127
    %v854 = vpop.permute.xlu0 %853
    %855 = vrot.lane.b32.xlu0 %v852, 127
    %v856 = vpop.permute.xlu0 %855
    %v857 = vsel %vm40, %v854, %v856
    %v859 = vsel %vm42, %v843, 0
    %v862 = vsel %vm46, %v857, 0
    %864 = vmatprep.subr.bf16.mxu0 0
    %865 = vmatpush1.bf16.msra.mxu0 0
    %866 = vmatprep.subr.bf16.mxu0 0
    %867 = vmatpush1.bf16.msra.mxu0 0
    %868 = vmatprep.subr.bf16.mxu0 0
    %869 = vmatpush1.bf16.msra.mxu0 0
    %870 = vmatprep.subr.bf16.mxu0 0
    %871 = vmatpush1.bf16.msra.mxu0 0
    %872 = vmatprep.subr.bf16.mxu0 0
    %873 = vmatpush1.bf16.msra.mxu0 0
    %874 = vmatprep.subr.bf16.mxu0 0
    %875 = vmatpush1.bf16.msra.mxu0 0
    %876 = vmatprep.subr.bf16.mxu0 0
    %877 = vmatpush1.bf16.msra.mxu0 0
    %878 = vmatprep.subr.bf16.mxu0 0
    %879 = vmatpush1.bf16.msra.mxu0 %v862
    %880 = vmatprep.subr.bf16.mxu0 0
    %881 = vmatpush2.bf16.msra.mxu0 0
    %882 = vmatprep.subr.bf16.mxu0 0
    %883 = vmatpush2.bf16.msra.mxu0 0
    %884 = vmatprep.subr.bf16.mxu0 0
    %885 = vmatpush2.bf16.msra.mxu0 0
    %886 = vmatprep.subr.bf16.mxu0 0
    %887 = vmatpush2.bf16.msra.mxu0 0
    %888 = vmatprep.subr.bf16.mxu0 0
    %889 = vmatpush2.bf16.msra.mxu0 0
    %890 = vmatprep.subr.bf16.mxu0 0
    %891 = vmatpush2.bf16.msra.mxu0 0
    %892 = vmatprep.subr.bf16.mxu0 0
    %893 = vmatpush2.bf16.msra.mxu0 0
    %894 = vmatprep.subr.bf16.mxu0 0
    %895 = vmatpush2.bf16.msra.mxu0 0
    %896 = vmatprep.mubr.bf16.mxu0 0
    %897 = vmatmul.mubr.bf16.gmra.mxu0 %v859
    %v898 = vpop.f32.mrf.mxu0
    %v899 = vadd.f32 0.0, %v898
    %v900 = vpop.f32.mrf.mxu0
    %v901 = vpop.f32.mrf.mxu0
    %v902 = vadd.f32 0.0, %v901
    %v903 = vpop.f32.mrf.mxu0
    %904 = vdwg.mxu0
    %v905 = vadd.f32 %v834, %v899
    %v906 = vadd.f32 %v835, %v902
    %s907 = scalar_lea.vmem %s1, 104
    %v908 = vld [vmem:[%s907] sm:$0xf]
    %v909 = vld [vmem:[%s907 + $0x4] sm:$0xf]
    %v912 = vunpack.c.l.b16 %v908
    %v913 = vunpack.c.l.b16 %v909
    %v914 = vpack.c.b16 %v913, %v912
    %915 = vrot.lane.b32.xlu0 %v851, 119
    %v916 = vpop.permute.xlu0 %915
    %917 = vrot.lane.b32.xlu0 %v852, 119
    %v918 = vpop.permute.xlu0 %917
    %v919 = vsel %vm155, %v916, %v918
    %v921 = vsel %vm42, %v914, 0
    %v924 = vsel %vm46, %v919, 0
    %926 = vmatprep.subr.bf16.mxu0 0
    %927 = vmatpush1.bf16.msra.mxu0 0
    %928 = vmatprep.subr.bf16.mxu0 0
    %929 = vmatpush1.bf16.msra.mxu0 0
    %930 = vmatprep.subr.bf16.mxu0 0
    %931 = vmatpush1.bf16.msra.mxu0 0
    %932 = vmatprep.subr.bf16.mxu0 0
    %933 = vmatpush1.bf16.msra.mxu0 0
    %934 = vmatprep.subr.bf16.mxu0 0
    %935 = vmatpush1.bf16.msra.mxu0 0
    %936 = vmatprep.subr.bf16.mxu0 0
    %937 = vmatpush1.bf16.msra.mxu0 0
    %938 = vmatprep.subr.bf16.mxu0 0
    %939 = vmatpush1.bf16.msra.mxu0 0
    %940 = vmatprep.subr.bf16.mxu0 0
    %941 = vmatpush1.bf16.msra.mxu0 %v924
    %942 = vmatprep.subr.bf16.mxu0 0
    %943 = vmatpush2.bf16.msra.mxu0 0
    %944 = vmatprep.subr.bf16.mxu0 0
    %945 = vmatpush2.bf16.msra.mxu0 0
    %946 = vmatprep.subr.bf16.mxu0 0
    %947 = vmatpush2.bf16.msra.mxu0 0
    %948 = vmatprep.subr.bf16.mxu0 0
    %949 = vmatpush2.bf16.msra.mxu0 0
    %950 = vmatprep.subr.bf16.mxu0 0
    %951 = vmatpush2.bf16.msra.mxu0 0
    %952 = vmatprep.subr.bf16.mxu0 0
    %953 = vmatpush2.bf16.msra.mxu0 0
    %954 = vmatprep.subr.bf16.mxu0 0
    %955 = vmatpush2.bf16.msra.mxu0 0
    %956 = vmatprep.subr.bf16.mxu0 0
    %957 = vmatpush2.bf16.msra.mxu0 0
    %958 = vmatprep.mubr.bf16.mxu0 0
    %959 = vmatmul.mubr.bf16.gmra.mxu0 %v921
    %v960 = vpop.f32.mrf.mxu0
    %v961 = vadd.f32 0.0, %v960
    %v962 = vpop.f32.mrf.mxu0
    %v963 = vpop.f32.mrf.mxu0
    %v964 = vadd.f32 0.0, %v963
    %v965 = vpop.f32.mrf.mxu0
    %966 = vdwg.mxu0
    %v967 = vadd.f32 %v905, %v961
    %v968 = vadd.f32 %v906, %v964
    %s969 = scalar_lea.vmem %s1, 120
    %v970 = vld [vmem:[%s969] sm:$0xf]
    %v971 = vld [vmem:[%s969 + $0x4] sm:$0xf]
    %v974 = vunpack.c.l.b16 %v970
    %v975 = vunpack.c.l.b16 %v971
    %v976 = vpack.c.b16 %v975, %v974
    %977 = vrot.lane.b32.xlu0 %v851, 118
    %v978 = vpop.permute.xlu0 %977
    %979 = vrot.lane.b32.xlu0 %v852, 118
    %v980 = vpop.permute.xlu0 %979
    %v981 = vsel %vm218, %v978, %v980
    %v983 = vsel %vm42, %v976, 0
    %v986 = vsel %vm46, %v981, 0
    %988 = vmatprep.subr.bf16.mxu0 0
    %989 = vmatpush1.bf16.msra.mxu0 0
    %990 = vmatprep.subr.bf16.mxu0 0
    %991 = vmatpush1.bf16.msra.mxu0 0
    %992 = vmatprep.subr.bf16.mxu0 0
    %993 = vmatpush1.bf16.msra.mxu0 0
    %994 = vmatprep.subr.bf16.mxu0 0
    %995 = vmatpush1.bf16.msra.mxu0 0
    %996 = vmatprep.subr.bf16.mxu0 0
    %997 = vmatpush1.bf16.msra.mxu0 0
    %998 = vmatprep.subr.bf16.mxu0 0
    %999 = vmatpush1.bf16.msra.mxu0 0
    %1000 = vmatprep.subr.bf16.mxu0 0
    %1001 = vmatpush1.bf16.msra.mxu0 0
    %1002 = vmatprep.subr.bf16.mxu0 0
    %1003 = vmatpush1.bf16.msra.mxu0 %v986
    %1004 = vmatprep.subr.bf16.mxu0 0
    %1005 = vmatpush2.bf16.msra.mxu0 0
    %1006 = vmatprep.subr.bf16.mxu0 0
    %1007 = vmatpush2.bf16.msra.mxu0 0
    %1008 = vmatprep.subr.bf16.mxu0 0
    %1009 = vmatpush2.bf16.msra.mxu0 0
    %1010 = vmatprep.subr.bf16.mxu0 0
    %1011 = vmatpush2.bf16.msra.mxu0 0
    %1012 = vmatprep.subr.bf16.mxu0 0
    %1013 = vmatpush2.bf16.msra.mxu0 0
    %1014 = vmatprep.subr.bf16.mxu0 0
    %1015 = vmatpush2.bf16.msra.mxu0 0
    %1016 = vmatprep.subr.bf16.mxu0 0
    %1017 = vmatpush2.bf16.msra.mxu0 0
    %1018 = vmatprep.subr.bf16.mxu0 0
    %1019 = vmatpush2.bf16.msra.mxu0 0
    %1020 = vmatprep.mubr.bf16.mxu0 0
    %1021 = vmatmul.mubr.bf16.gmra.mxu0 %v983
    %v1022 = vpop.f32.mrf.mxu0
    %v1023 = vadd.f32 0.0, %v1022
    %v1024 = vpop.f32.mrf.mxu0
    %v1025 = vpop.f32.mrf.mxu0
    %v1026 = vadd.f32 0.0, %v1025
    %v1027 = vpop.f32.mrf.mxu0
    %1028 = vdwg.mxu0
    %v1029 = vadd.f32 %v967, %v1023
    %v1030 = vadd.f32 %v968, %v1026
    %v1031 = vld [vmem:[%s2] sm:$0xff]
    %v1032 = vld [vmem:[%s2 + $0x8] sm:$0xff]
    %1034 = vset.pattern.permute.xlu0 0
    %1035 = vperm.xlu0 %1034, %v1031
    %v1036 = vpop.permute.xlu0 %1035
    %1039 = vset.pattern.permute.xlu0 0
    %1040 = vperm.xlu0 %1039, %v1032
    %v1041 = vpop.permute.xlu0 %1040
    %v1043 = vadd.f32 %v1029, %v1036
    %v1044 = vadd.f32 %v1030, %v1041
    %v1045 = vmul.f32 %v1043, 0.2
    %v1046 = vmul.f32 %v1044, 0.2
    %v1047 = vmax.f32 %v1043, %v1045
    %v1048 = vmax.f32 %v1044, %v1046
    %v1049 = vpack.c.bf16 %v1048, %v1047
    %v1051 = vunpack.c.l.b16 %v1049
    %v1052 = vunpack.c.h.b16 %v1049
    %v1053 = vpack.c.b16 %v1051, %v1051
    %v1054 = vpack.c.b16 %v1052, %v1052
    %1057 = vst [vmem:[#allocation2] sm:$0xf] %v1053
    %1058 = vst [vmem:[#allocation2 + $0x4] sm:$0xf] %v1054
    %s1059 = scalar_lea.vmem %s0, 16
    %v1060 = vld [vmem:[%s1059] sm:$0xf]
    %v1061 = vld [vmem:[%s1] sm:$0xf]
    %v1062 = vld [vmem:[%s1 + $0x4] sm:$0xf]
    %v1063 = vld [vmem:[%s19] sm:$0xf]
    %v1064 = vld [vmem:[%s19 + $0x4] sm:$0xf]
    %v1067 = vunpack.c.l.b16 %v1063
    %v1068 = vunpack.c.l.b16 %v1064
    %v1069 = vpack.c.b16 %v1068, %v1067
    %v1072 = vunpack.c.l.s4 1983009808
    %v1073 = vunpack.c.0.s8 %v1072
    %v1074 = vlaneseq
    %v1075 = vshrl.u32 %v1074, 7
    %v1076 = vsub.s32 %v1073, %v1075
    %v1077 = vrot.slane %v1060, %v1076
    %v1078 = vcombine.high %v1077, %v1077
    %1079 = vrot.lane.b32.xlu0 %v1077, 127
    %v1080 = vpop.permute.xlu0 %1079
    %1081 = vrot.lane.b32.xlu0 %v1078, 127
    %v1082 = vpop.permute.xlu0 %1081
    %v1083 = vsel %vm40, %v1080, %v1082
    %v1085 = vsel %vm42, %v1069, 0
    %v1088 = vsel %vm46, %v1083, 0
    %1090 = vmatprep.subr.bf16.mxu0 0
    %1091 = vmatpush1.bf16.msra.mxu0 0
    %1092 = vmatprep.subr.bf16.mxu0 0
    %1093 = vmatpush1.bf16.msra.mxu0 0
    %1094 = vmatprep.subr.bf16.mxu0 0
    %1095 = vmatpush1.bf16.msra.mxu0 0
    %1096 = vmatprep.subr.bf16.mxu0 0
    %1097 = vmatpush1.bf16.msra.mxu0 0
    %1098 = vmatprep.subr.bf16.mxu0 0
    %1099 = vmatpush1.bf16.msra.mxu0 0
    %1100 = vmatprep.subr.bf16.mxu0 0
    %1101 = vmatpush1.bf16.msra.mxu0 0
    %1102 = vmatprep.subr.bf16.mxu0 0
    %1103 = vmatpush1.bf16.msra.mxu0 0
    %1104 = vmatprep.subr.bf16.mxu0 0
    %1105 = vmatpush1.bf16.msra.mxu0 %v1088
    %1106 = vmatprep.subr.bf16.mxu0 0
    %1107 = vmatpush2.bf16.msra.mxu0 0
    %1108 = vmatprep.subr.bf16.mxu0 0
    %1109 = vmatpush2.bf16.msra.mxu0 0
    %1110 = vmatprep.subr.bf16.mxu0 0
    %1111 = vmatpush2.bf16.msra.mxu0 0
    %1112 = vmatprep.subr.bf16.mxu0 0
    %1113 = vmatpush2.bf16.msra.mxu0 0
    %1114 = vmatprep.subr.bf16.mxu0 0
    %1115 = vmatpush2.bf16.msra.mxu0 0
    %1116 = vmatprep.subr.bf16.mxu0 0
    %1117 = vmatpush2.bf16.msra.mxu0 0
    %1118 = vmatprep.subr.bf16.mxu0 0
    %1119 = vmatpush2.bf16.msra.mxu0 0
    %1120 = vmatprep.subr.bf16.mxu0 0
    %1121 = vmatpush2.bf16.msra.mxu0 0
    %1122 = vmatprep.mubr.bf16.mxu0 0
    %1123 = vmatmul.mubr.bf16.gmra.mxu0 %v1085
    %v1124 = vpop.f32.mrf.mxu0
    %v1125 = vadd.f32 0.0, %v1124
    %v1126 = vpop.f32.mrf.mxu0
    %v1127 = vpop.f32.mrf.mxu0
    %v1128 = vadd.f32 0.0, %v1127
    %v1129 = vpop.f32.mrf.mxu0
    %1130 = vdwg.mxu0
    %v1133 = vunpack.c.l.b16 %v1061
    %v1134 = vunpack.c.l.b16 %v1062
    %v1135 = vpack.c.b16 %v1134, %v1133
    %v1137 = vsel %vm42, %v1135, 0
    %v1140 = vsel %vm46, %v1060, 0
    %1142 = vmatprep.subr.bf16.mxu0 0
    %1143 = vmatpush1.bf16.msra.mxu0 0
    %1144 = vmatprep.subr.bf16.mxu0 0
    %1145 = vmatpush1.bf16.msra.mxu0 0
    %1146 = vmatprep.subr.bf16.mxu0 0
    %1147 = vmatpush1.bf16.msra.mxu0 0
    %1148 = vmatprep.subr.bf16.mxu0 0
    %1149 = vmatpush1.bf16.msra.mxu0 0
    %1150 = vmatprep.subr.bf16.mxu0 0
    %1151 = vmatpush1.bf16.msra.mxu0 0
    %1152 = vmatprep.subr.bf16.mxu0 0
    %1153 = vmatpush1.bf16.msra.mxu0 0
    %1154 = vmatprep.subr.bf16.mxu0 0
    %1155 = vmatpush1.bf16.msra.mxu0 0
    %1156 = vmatprep.subr.bf16.mxu0 0
    %1157 = vmatpush1.bf16.msra.mxu0 %v1140
    %1158 = vmatprep.subr.bf16.mxu0 0
    %1159 = vmatpush2.bf16.msra.mxu0 0
    %1160 = vmatprep.subr.bf16.mxu0 0
    %1161 = vmatpush2.bf16.msra.mxu0 0
    %1162 = vmatprep.subr.bf16.mxu0 0
    %1163 = vmatpush2.bf16.msra.mxu0 0
    %1164 = vmatprep.subr.bf16.mxu0 0
    %1165 = vmatpush2.bf16.msra.mxu0 0
    %1166 = vmatprep.subr.bf16.mxu0 0
    %1167 = vmatpush2.bf16.msra.mxu0 0
    %1168 = vmatprep.subr.bf16.mxu0 0
    %1169 = vmatpush2.bf16.msra.mxu0 0
    %1170 = vmatprep.subr.bf16.mxu0 0
    %1171 = vmatpush2.bf16.msra.mxu0 0
    %1172 = vmatprep.subr.bf16.mxu0 0
    %1173 = vmatpush2.bf16.msra.mxu0 0
    %1174 = vmatprep.mubr.bf16.mxu0 0
    %1175 = vmatmul.mubr.bf16.gmra.mxu0 %v1137
    %v1176 = vpop.f32.mrf.mxu0
    %v1177 = vadd.f32 %v1125, %v1176
    %v1178 = vpop.f32.mrf.mxu0
    %v1179 = vpop.f32.mrf.mxu0
    %v1180 = vadd.f32 %v1128, %v1179
    %v1181 = vpop.f32.mrf.mxu0
    %1182 = vdwg.mxu0
    %v1183 = vld [vmem:[%s143] sm:$0xf]
    %v1184 = vld [vmem:[%s143 + $0x4] sm:$0xf]
    %v1187 = vunpack.c.l.b16 %v1183
    %v1188 = vunpack.c.l.b16 %v1184
    %v1189 = vpack.c.b16 %v1188, %v1187
    %1190 = vrot.lane.b32.xlu0 %v1077, 119
    %v1191 = vpop.permute.xlu0 %1190
    %1192 = vrot.lane.b32.xlu0 %v1078, 119
    %v1193 = vpop.permute.xlu0 %1192
    %v1194 = vsel %vm155, %v1191, %v1193
    %v1196 = vsel %vm42, %v1189, 0
    %v1199 = vsel %vm46, %v1194, 0
    %1201 = vmatprep.subr.bf16.mxu0 0
    %1202 = vmatpush1.bf16.msra.mxu0 0
    %1203 = vmatprep.subr.bf16.mxu0 0
    %1204 = vmatpush1.bf16.msra.mxu0 0
    %1205 = vmatprep.subr.bf16.mxu0 0
    %1206 = vmatpush1.bf16.msra.mxu0 0
    %1207 = vmatprep.subr.bf16.mxu0 0
    %1208 = vmatpush1.bf16.msra.mxu0 0
    %1209 = vmatprep.subr.bf16.mxu0 0
    %1210 = vmatpush1.bf16.msra.mxu0 0
    %1211 = vmatprep.subr.bf16.mxu0 0
    %1212 = vmatpush1.bf16.msra.mxu0 0
    %1213 = vmatprep.subr.bf16.mxu0 0
    %1214 = vmatpush1.bf16.msra.mxu0 0
    %1215 = vmatprep.subr.bf16.mxu0 0
    %1216 = vmatpush1.bf16.msra.mxu0 %v1199
    %1217 = vmatprep.subr.bf16.mxu0 0
    %1218 = vmatpush2.bf16.msra.mxu0 0
    %1219 = vmatprep.subr.bf16.mxu0 0
    %1220 = vmatpush2.bf16.msra.mxu0 0
    %1221 = vmatprep.subr.bf16.mxu0 0
    %1222 = vmatpush2.bf16.msra.mxu0 0
    %1223 = vmatprep.subr.bf16.mxu0 0
    %1224 = vmatpush2.bf16.msra.mxu0 0
    %1225 = vmatprep.subr.bf16.mxu0 0
    %1226 = vmatpush2.bf16.msra.mxu0 0
    %1227 = vmatprep.subr.bf16.mxu0 0
    %1228 = vmatpush2.bf16.msra.mxu0 0
    %1229 = vmatprep.subr.bf16.mxu0 0
    %1230 = vmatpush2.bf16.msra.mxu0 0
    %1231 = vmatprep.subr.bf16.mxu0 0
    %1232 = vmatpush2.bf16.msra.mxu0 0
    %1233 = vmatprep.mubr.bf16.mxu0 0
    %1234 = vmatmul.mubr.bf16.gmra.mxu0 %v1196
    %v1235 = vpop.f32.mrf.mxu0
    %v1236 = vadd.f32 0.0, %v1235
    %v1237 = vpop.f32.mrf.mxu0
    %v1238 = vpop.f32.mrf.mxu0
    %v1239 = vadd.f32 0.0, %v1238
    %v1240 = vpop.f32.mrf.mxu0
    %1241 = vdwg.mxu0
    %v1242 = vadd.f32 %v1177, %v1236
    %v1243 = vadd.f32 %v1180, %v1239
    %v1244 = vld [vmem:[%s206] sm:$0xf]
    %v1245 = vld [vmem:[%s206 + $0x4] sm:$0xf]
    %v1248 = vunpack.c.l.b16 %v1244
    %v1249 = vunpack.c.l.b16 %v1245
    %v1250 = vpack.c.b16 %v1249, %v1248
    %1251 = vrot.lane.b32.xlu0 %v1077, 118
    %v1252 = vpop.permute.xlu0 %1251
    %1253 = vrot.lane.b32.xlu0 %v1078, 118
    %v1254 = vpop.permute.xlu0 %1253
    %v1255 = vsel %vm218, %v1252, %v1254
    %v1257 = vsel %vm42, %v1250, 0
    %v1260 = vsel %vm46, %v1255, 0
    %1262 = vmatprep.subr.bf16.mxu0 0
    %1263 = vmatpush1.bf16.msra.mxu0 0
    %1264 = vmatprep.subr.bf16.mxu0 0
    %1265 = vmatpush1.bf16.msra.mxu0 0
    %1266 = vmatprep.subr.bf16.mxu0 0
    %1267 = vmatpush1.bf16.msra.mxu0 0
    %1268 = vmatprep.subr.bf16.mxu0 0
    %1269 = vmatpush1.bf16.msra.mxu0 0
    %1270 = vmatprep.subr.bf16.mxu0 0
    %1271 = vmatpush1.bf16.msra.mxu0 0
    %1272 = vmatprep.subr.bf16.mxu0 0
    %1273 = vmatpush1.bf16.msra.mxu0 0
    %1274 = vmatprep.subr.bf16.mxu0 0
    %1275 = vmatpush1.bf16.msra.mxu0 0
    %1276 = vmatprep.subr.bf16.mxu0 0
    %1277 = vmatpush1.bf16.msra.mxu0 %v1260
    %1278 = vmatprep.subr.bf16.mxu0 0
    %1279 = vmatpush2.bf16.msra.mxu0 0
    %1280 = vmatprep.subr.bf16.mxu0 0
    %1281 = vmatpush2.bf16.msra.mxu0 0
    %1282 = vmatprep.subr.bf16.mxu0 0
    %1283 = vmatpush2.bf16.msra.mxu0 0
    %1284 = vmatprep.subr.bf16.mxu0 0
    %1285 = vmatpush2.bf16.msra.mxu0 0
    %1286 = vmatprep.subr.bf16.mxu0 0
    %1287 = vmatpush2.bf16.msra.mxu0 0
    %1288 = vmatprep.subr.bf16.mxu0 0
    %1289 = vmatpush2.bf16.msra.mxu0 0
    %1290 = vmatprep.subr.bf16.mxu0 0
    %1291 = vmatpush2.bf16.msra.mxu0 0
    %1292 = vmatprep.subr.bf16.mxu0 0
    %1293 = vmatpush2.bf16.msra.mxu0 0
    %1294 = vmatprep.mubr.bf16.mxu0 0
    %1295 = vmatmul.mubr.bf16.gmra.mxu0 %v1257
    %v1296 = vpop.f32.mrf.mxu0
    %v1297 = vadd.f32 0.0, %v1296
    %v1298 = vpop.f32.mrf.mxu0
    %v1299 = vpop.f32.mrf.mxu0
    %v1300 = vadd.f32 0.0, %v1299
    %v1301 = vpop.f32.mrf.mxu0
    %1302 = vdwg.mxu0
    %v1303 = vadd.f32 %v1242, %v1297
    %v1304 = vadd.f32 %v1243, %v1300
    %s1305 = scalar_lea.vmem %s0, 20
    %v1306 = vld [vmem:[%s1305] sm:$0xf]
    %v1307 = vld [vmem:[%s271] sm:$0xf]
    %v1308 = vld [vmem:[%s271 + $0x4] sm:$0xf]
    %v1311 = vunpack.c.l.b16 %v1307
    %v1312 = vunpack.c.l.b16 %v1308
    %v1313 = vpack.c.b16 %v1312, %v1311
    %v1315 = vsel %vm42, %v1313, 0
    %v1318 = vsel %vm46, %v1306, 0
    %1320 = vmatprep.subr.bf16.mxu0 0
    %1321 = vmatpush1.bf16.msra.mxu0 0
    %1322 = vmatprep.subr.bf16.mxu0 0
    %1323 = vmatpush1.bf16.msra.mxu0 0
    %1324 = vmatprep.subr.bf16.mxu0 0
    %1325 = vmatpush1.bf16.msra.mxu0 0
    %1326 = vmatprep.subr.bf16.mxu0 0
    %1327 = vmatpush1.bf16.msra.mxu0 0
    %1328 = vmatprep.subr.bf16.mxu0 0
    %1329 = vmatpush1.bf16.msra.mxu0 0
    %1330 = vmatprep.subr.bf16.mxu0 0
    %1331 = vmatpush1.bf16.msra.mxu0 0
    %1332 = vmatprep.subr.bf16.mxu0 0
    %1333 = vmatpush1.bf16.msra.mxu0 0
    %1334 = vmatprep.subr.bf16.mxu0 0
    %1335 = vmatpush1.bf16.msra.mxu0 %v1318
    %1336 = vmatprep.subr.bf16.mxu0 0
    %1337 = vmatpush2.bf16.msra.mxu0 0
    %1338 = vmatprep.subr.bf16.mxu0 0
    %1339 = vmatpush2.bf16.msra.mxu0 0
    %1340 = vmatprep.subr.bf16.mxu0 0
    %1341 = vmatpush2.bf16.msra.mxu0 0
    %1342 = vmatprep.subr.bf16.mxu0 0
    %1343 = vmatpush2.bf16.msra.mxu0 0
    %1344 = vmatprep.subr.bf16.mxu0 0
    %1345 = vmatpush2.bf16.msra.mxu0 0
    %1346 = vmatprep.subr.bf16.mxu0 0
    %1347 = vmatpush2.bf16.msra.mxu0 0
    %1348 = vmatprep.subr.bf16.mxu0 0
    %1349 = vmatpush2.bf16.msra.mxu0 0
    %1350 = vmatprep.subr.bf16.mxu0 0
    %1351 = vmatpush2.bf16.msra.mxu0 0
    %1352 = vmatprep.mubr.bf16.mxu0 0
    %1353 = vmatmul.mubr.bf16.gmra.mxu0 %v1315
    %v1354 = vpop.f32.mrf.mxu0
    %v1355 = vadd.f32 0.0, %v1354
    %v1356 = vpop.f32.mrf.mxu0
    %v1357 = vpop.f32.mrf.mxu0
    %v1358 = vadd.f32 0.0, %v1357
    %v1359 = vpop.f32.mrf.mxu0
    %1360 = vdwg.mxu0
    %v1361 = vadd.f32 %v1303, %v1355
    %v1362 = vadd.f32 %v1304, %v1358
    %v1363 = vld [vmem:[%s328] sm:$0xf]
    %v1364 = vld [vmem:[%s328 + $0x4] sm:$0xf]
    %v1367 = vunpack.c.l.b16 %v1363
    %v1368 = vunpack.c.l.b16 %v1364
    %v1369 = vpack.c.b16 %v1368, %v1367
    %v1372 = vunpack.c.l.s4 1983009808
    %v1373 = vunpack.c.0.s8 %v1372
    %v1374 = vlaneseq
    %v1375 = vshrl.u32 %v1374, 7
    %v1376 = vsub.s32 %v1373, %v1375
    %v1377 = vrot.slane %v1306, %v1376
    %v1378 = vcombine.high %v1377, %v1377
    %1379 = vrot.lane.b32.xlu0 %v1377, 127
    %v1380 = vpop.permute.xlu0 %1379
    %1381 = vrot.lane.b32.xlu0 %v1378, 127
    %v1382 = vpop.permute.xlu0 %1381
    %v1383 = vsel %vm40, %v1380, %v1382
    %v1385 = vsel %vm42, %v1369, 0
    %v1388 = vsel %vm46, %v1383, 0
    %1390 = vmatprep.subr.bf16.mxu0 0
    %1391 = vmatpush1.bf16.msra.mxu0 0
    %1392 = vmatprep.subr.bf16.mxu0 0
    %1393 = vmatpush1.bf16.msra.mxu0 0
    %1394 = vmatprep.subr.bf16.mxu0 0
    %1395 = vmatpush1.bf16.msra.mxu0 0
    %1396 = vmatprep.subr.bf16.mxu0 0
    %1397 = vmatpush1.bf16.msra.mxu0 0
    %1398 = vmatprep.subr.bf16.mxu0 0
    %1399 = vmatpush1.bf16.msra.mxu0 0
    %1400 = vmatprep.subr.bf16.mxu0 0
    %1401 = vmatpush1.bf16.msra.mxu0 0
    %1402 = vmatprep.subr.bf16.mxu0 0
    %1403 = vmatpush1.bf16.msra.mxu0 0
    %1404 = vmatprep.subr.bf16.mxu0 0
    %1405 = vmatpush1.bf16.msra.mxu0 %v1388
    %1406 = vmatprep.subr.bf16.mxu0 0
    %1407 = vmatpush2.bf16.msra.mxu0 0
    %1408 = vmatprep.subr.bf16.mxu0 0
    %1409 = vmatpush2.bf16.msra.mxu0 0
    %1410 = vmatprep.subr.bf16.mxu0 0
    %1411 = vmatpush2.bf16.msra.mxu0 0
    %1412 = vmatprep.subr.bf16.mxu0 0
    %1413 = vmatpush2.bf16.msra.mxu0 0
    %1414 = vmatprep.subr.bf16.mxu0 0
    %1415 = vmatpush2.bf16.msra.mxu0 0
    %1416 = vmatprep.subr.bf16.mxu0 0
    %1417 = vmatpush2.bf16.msra.mxu0 0
    %1418 = vmatprep.subr.bf16.mxu0 0
    %1419 = vmatpush2.bf16.msra.mxu0 0
    %1420 = vmatprep.subr.bf16.mxu0 0
    %1421 = vmatpush2.bf16.msra.mxu0 0
    %1422 = vmatprep.mubr.bf16.mxu0 0
    %1423 = vmatmul.mubr.bf16.gmra.mxu0 %v1385
    %v1424 = vpop.f32.mrf.mxu0
    %v1425 = vadd.f32 0.0, %v1424
    %v1426 = vpop.f32.mrf.mxu0
    %v1427 = vpop.f32.mrf.mxu0
    %v1428 = vadd.f32 0.0, %v1427
    %v1429 = vpop.f32.mrf.mxu0
    %1430 = vdwg.mxu0
    %v1431 = vadd.f32 %v1361, %v1425
    %v1432 = vadd.f32 %v1362, %v1428
    %v1433 = vld [vmem:[%s399] sm:$0xf]
    %v1434 = vld [vmem:[%s399 + $0x4] sm:$0xf]
    %v1437 = vunpack.c.l.b16 %v1433
    %v1438 = vunpack.c.l.b16 %v1434
    %v1439 = vpack.c.b16 %v1438, %v1437
    %1440 = vrot.lane.b32.xlu0 %v1377, 119
    %v1441 = vpop.permute.xlu0 %1440
    %1442 = vrot.lane.b32.xlu0 %v1378, 119
    %v1443 = vpop.permute.xlu0 %1442
    %v1444 = vsel %vm155, %v1441, %v1443
    %v1446 = vsel %vm42, %v1439, 0
    %v1449 = vsel %vm46, %v1444, 0
    %1451 = vmatprep.subr.bf16.mxu0 0
    %1452 = vmatpush1.bf16.msra.mxu0 0
    %1453 = vmatprep.subr.bf16.mxu0 0
    %1454 = vmatpush1.bf16.msra.mxu0 0
    %1455 = vmatprep.subr.bf16.mxu0 0
    %1456 = vmatpush1.bf16.msra.mxu0 0
    %1457 = vmatprep.subr.bf16.mxu0 0
    %1458 = vmatpush1.bf16.msra.mxu0 0
    %1459 = vmatprep.subr.bf16.mxu0 0
    %1460 = vmatpush1.bf16.msra.mxu0 0
    %1461 = vmatprep.subr.bf16.mxu0 0
    %1462 = vmatpush1.bf16.msra.mxu0 0
    %1463 = vmatprep.subr.bf16.mxu0 0
    %1464 = vmatpush1.bf16.msra.mxu0 0
    %1465 = vmatprep.subr.bf16.mxu0 0
    %1466 = vmatpush1.bf16.msra.mxu0 %v1449
    %1467 = vmatprep.subr.bf16.mxu0 0
    %1468 = vmatpush2.bf16.msra.mxu0 0
    %1469 = vmatprep.subr.bf16.mxu0 0
    %1470 = vmatpush2.bf16.msra.mxu0 0
    %1471 = vmatprep.subr.bf16.mxu0 0
    %1472 = vmatpush2.bf16.msra.mxu0 0
    %1473 = vmatprep.subr.bf16.mxu0 0
    %1474 = vmatpush2.bf16.msra.mxu0 0
    %1475 = vmatprep.subr.bf16.mxu0 0
    %1476 = vmatpush2.bf16.msra.mxu0 0
    %1477 = vmatprep.subr.bf16.mxu0 0
    %1478 = vmatpush2.bf16.msra.mxu0 0
    %1479 = vmatprep.subr.bf16.mxu0 0
    %1480 = vmatpush2.bf16.msra.mxu0 0
    %1481 = vmatprep.subr.bf16.mxu0 0
    %1482 = vmatpush2.bf16.msra.mxu0 0
    %1483 = vmatprep.mubr.bf16.mxu0 0
    %1484 = vmatmul.mubr.bf16.gmra.mxu0 %v1446
    %v1485 = vpop.f32.mrf.mxu0
    %v1486 = vadd.f32 0.0, %v1485
    %v1487 = vpop.f32.mrf.mxu0
    %v1488 = vpop.f32.mrf.mxu0
    %v1489 = vadd.f32 0.0, %v1488
    %v1490 = vpop.f32.mrf.mxu0
    %1491 = vdwg.mxu0
    %v1492 = vadd.f32 %v1431, %v1486
    %v1493 = vadd.f32 %v1432, %v1489
    %v1494 = vld [vmem:[%s461] sm:$0xf]
    %v1495 = vld [vmem:[%s461 + $0x4] sm:$0xf]
    %v1498 = vunpack.c.l.b16 %v1494
    %v1499 = vunpack.c.l.b16 %v1495
    %v1500 = vpack.c.b16 %v1499, %v1498
    %1501 = vrot.lane.b32.xlu0 %v1377, 118
    %v1502 = vpop.permute.xlu0 %1501
    %1503 = vrot.lane.b32.xlu0 %v1378, 118
    %v1504 = vpop.permute.xlu0 %1503
    %v1505 = vsel %vm218, %v1502, %v1504
    %v1507 = vsel %vm42, %v1500, 0
    %v1510 = vsel %vm46, %v1505, 0
    %1512 = vmatprep.subr.bf16.mxu0 0
    %1513 = vmatpush1.bf16.msra.mxu0 0
    %1514 = vmatprep.subr.bf16.mxu0 0
    %1515 = vmatpush1.bf16.msra.mxu0 0
    %1516 = vmatprep.subr.bf16.mxu0 0
    %1517 = vmatpush1.bf16.msra.mxu0 0
    %1518 = vmatprep.subr.bf16.mxu0 0
    %1519 = vmatpush1.bf16.msra.mxu0 0
    %1520 = vmatprep.subr.bf16.mxu0 0
    %1521 = vmatpush1.bf16.msra.mxu0 0
    %1522 = vmatprep.subr.bf16.mxu0 0
    %1523 = vmatpush1.bf16.msra.mxu0 0
    %1524 = vmatprep.subr.bf16.mxu0 0
    %1525 = vmatpush1.bf16.msra.mxu0 0
    %1526 = vmatprep.subr.bf16.mxu0 0
    %1527 = vmatpush1.bf16.msra.mxu0 %v1510
    %1528 = vmatprep.subr.bf16.mxu0 0
    %1529 = vmatpush2.bf16.msra.mxu0 0
    %1530 = vmatprep.subr.bf16.mxu0 0
    %1531 = vmatpush2.bf16.msra.mxu0 0
    %1532 = vmatprep.subr.bf16.mxu0 0
    %1533 = vmatpush2.bf16.msra.mxu0 0
    %1534 = vmatprep.subr.bf16.mxu0 0
    %1535 = vmatpush2.bf16.msra.mxu0 0
    %1536 = vmatprep.subr.bf16.mxu0 0
    %1537 = vmatpush2.bf16.msra.mxu0 0
    %1538 = vmatprep.subr.bf16.mxu0 0
    %1539 = vmatpush2.bf16.msra.mxu0 0
    %1540 = vmatprep.subr.bf16.mxu0 0
    %1541 = vmatpush2.bf16.msra.mxu0 0
    %1542 = vmatprep.subr.bf16.mxu0 0
    %1543 = vmatpush2.bf16.msra.mxu0 0
    %1544 = vmatprep.mubr.bf16.mxu0 0
    %1545 = vmatmul.mubr.bf16.gmra.mxu0 %v1507
    %v1546 = vpop.f32.mrf.mxu0
    %v1547 = vadd.f32 0.0, %v1546
    %v1548 = vpop.f32.mrf.mxu0
    %v1549 = vpop.f32.mrf.mxu0
    %v1550 = vadd.f32 0.0, %v1549
    %v1551 = vpop.f32.mrf.mxu0
    %1552 = vdwg.mxu0
    %v1553 = vadd.f32 %v1492, %v1547
    %v1554 = vadd.f32 %v1493, %v1550
    %s1555 = scalar_lea.vmem %s0, 24
    %v1556 = vld [vmem:[%s1555] sm:$0xf]
    %v1557 = vld [vmem:[%s525] sm:$0xf]
    %v1558 = vld [vmem:[%s525 + $0x4] sm:$0xf]
    %v1561 = vunpack.c.l.b16 %v1557
    %v1562 = vunpack.c.l.b16 %v1558
    %v1563 = vpack.c.b16 %v1562, %v1561
    %v1565 = vsel %vm42, %v1563, 0
    %v1568 = vsel %vm46, %v1556, 0
    %1570 = vmatprep.subr.bf16.mxu0 0
    %1571 = vmatpush1.bf16.msra.mxu0 0
    %1572 = vmatprep.subr.bf16.mxu0 0
    %1573 = vmatpush1.bf16.msra.mxu0 0
    %1574 = vmatprep.subr.bf16.mxu0 0
    %1575 = vmatpush1.bf16.msra.mxu0 0
    %1576 = vmatprep.subr.bf16.mxu0 0
    %1577 = vmatpush1.bf16.msra.mxu0 0
    %1578 = vmatprep.subr.bf16.mxu0 0
    %1579 = vmatpush1.bf16.msra.mxu0 0
    %1580 = vmatprep.subr.bf16.mxu0 0
    %1581 = vmatpush1.bf16.msra.mxu0 0
    %1582 = vmatprep.subr.bf16.mxu0 0
    %1583 = vmatpush1.bf16.msra.mxu0 0
    %1584 = vmatprep.subr.bf16.mxu0 0
    %1585 = vmatpush1.bf16.msra.mxu0 %v1568
    %1586 = vmatprep.subr.bf16.mxu0 0
    %1587 = vmatpush2.bf16.msra.mxu0 0
    %1588 = vmatprep.subr.bf16.mxu0 0
    %1589 = vmatpush2.bf16.msra.mxu0 0
    %1590 = vmatprep.subr.bf16.mxu0 0
    %1591 = vmatpush2.bf16.msra.mxu0 0
    %1592 = vmatprep.subr.bf16.mxu0 0
    %1593 = vmatpush2.bf16.msra.mxu0 0
    %1594 = vmatprep.subr.bf16.mxu0 0
    %1595 = vmatpush2.bf16.msra.mxu0 0
    %1596 = vmatprep.subr.bf16.mxu0 0
    %1597 = vmatpush2.bf16.msra.mxu0 0
    %1598 = vmatprep.subr.bf16.mxu0 0
    %1599 = vmatpush2.bf16.msra.mxu0 0
    %1600 = vmatprep.subr.bf16.mxu0 0
    %1601 = vmatpush2.bf16.msra.mxu0 0
    %1602 = vmatprep.mubr.bf16.mxu0 0
    %1603 = vmatmul.mubr.bf16.gmra.mxu0 %v1565
    %v1604 = vpop.f32.mrf.mxu0
    %v1605 = vadd.f32 0.0, %v1604
    %v1606 = vpop.f32.mrf.mxu0
    %v1607 = vpop.f32.mrf.mxu0
    %v1608 = vadd.f32 0.0, %v1607
    %v1609 = vpop.f32.mrf.mxu0
    %1610 = vdwg.mxu0
    %v1611 = vadd.f32 %v1553, %v1605
    %v1612 = vadd.f32 %v1554, %v1608
    %v1613 = vld [vmem:[%s582] sm:$0xf]
    %v1614 = vld [vmem:[%s582 + $0x4] sm:$0xf]
    %v1617 = vunpack.c.l.b16 %v1613
    %v1618 = vunpack.c.l.b16 %v1614
    %v1619 = vpack.c.b16 %v1618, %v1617
    %v1622 = vunpack.c.l.s4 1983009808
    %v1623 = vunpack.c.0.s8 %v1622
    %v1624 = vlaneseq
    %v1625 = vshrl.u32 %v1624, 7
    %v1626 = vsub.s32 %v1623, %v1625
    %v1627 = vrot.slane %v1556, %v1626
    %v1628 = vcombine.high %v1627, %v1627
    %1629 = vrot.lane.b32.xlu0 %v1627, 127
    %v1630 = vpop.permute.xlu0 %1629
    %1631 = vrot.lane.b32.xlu0 %v1628, 127
    %v1632 = vpop.permute.xlu0 %1631
    %v1633 = vsel %vm40, %v1630, %v1632
    %v1635 = vsel %vm42, %v1619, 0
    %v1638 = vsel %vm46, %v1633, 0
    %1640 = vmatprep.subr.bf16.mxu0 0
    %1641 = vmatpush1.bf16.msra.mxu0 0
    %1642 = vmatprep.subr.bf16.mxu0 0
    %1643 = vmatpush1.bf16.msra.mxu0 0
    %1644 = vmatprep.subr.bf16.mxu0 0
    %1645 = vmatpush1.bf16.msra.mxu0 0
    %1646 = vmatprep.subr.bf16.mxu0 0
    %1647 = vmatpush1.bf16.msra.mxu0 0
    %1648 = vmatprep.subr.bf16.mxu0 0
    %1649 = vmatpush1.bf16.msra.mxu0 0
    %1650 = vmatprep.subr.bf16.mxu0 0
    %1651 = vmatpush1.bf16.msra.mxu0 0
    %1652 = vmatprep.subr.bf16.mxu0 0
    %1653 = vmatpush1.bf16.msra.mxu0 0
    %1654 = vmatprep.subr.bf16.mxu0 0
    %1655 = vmatpush1.bf16.msra.mxu0 %v1638
    %1656 = vmatprep.subr.bf16.mxu0 0
    %1657 = vmatpush2.bf16.msra.mxu0 0
    %1658 = vmatprep.subr.bf16.mxu0 0
    %1659 = vmatpush2.bf16.msra.mxu0 0
    %1660 = vmatprep.subr.bf16.mxu0 0
    %1661 = vmatpush2.bf16.msra.mxu0 0
    %1662 = vmatprep.subr.bf16.mxu0 0
    %1663 = vmatpush2.bf16.msra.mxu0 0
    %1664 = vmatprep.subr.bf16.mxu0 0
    %1665 = vmatpush2.bf16.msra.mxu0 0
    %1666 = vmatprep.subr.bf16.mxu0 0
    %1667 = vmatpush2.bf16.msra.mxu0 0
    %1668 = vmatprep.subr.bf16.mxu0 0
    %1669 = vmatpush2.bf16.msra.mxu0 0
    %1670 = vmatprep.subr.bf16.mxu0 0
    %1671 = vmatpush2.bf16.msra.mxu0 0
    %1672 = vmatprep.mubr.bf16.mxu0 0
    %1673 = vmatmul.mubr.bf16.gmra.mxu0 %v1635
    %v1674 = vpop.f32.mrf.mxu0
    %v1675 = vadd.f32 0.0, %v1674
    %v1676 = vpop.f32.mrf.mxu0
    %v1677 = vpop.f32.mrf.mxu0
    %v1678 = vadd.f32 0.0, %v1677
    %v1679 = vpop.f32.mrf.mxu0
    %1680 = vdwg.mxu0
    %v1681 = vadd.f32 %v1611, %v1675
    %v1682 = vadd.f32 %v1612, %v1678
    %v1683 = vld [vmem:[%s653] sm:$0xf]
    %v1684 = vld [vmem:[%s653 + $0x4] sm:$0xf]
    %v1687 = vunpack.c.l.b16 %v1683
    %v1688 = vunpack.c.l.b16 %v1684
    %v1689 = vpack.c.b16 %v1688, %v1687
    %1690 = vrot.lane.b32.xlu0 %v1627, 119
    %v1691 = vpop.permute.xlu0 %1690
    %1692 = vrot.lane.b32.xlu0 %v1628, 119
    %v1693 = vpop.permute.xlu0 %1692
    %v1694 = vsel %vm155, %v1691, %v1693
    %v1696 = vsel %vm42, %v1689, 0
    %v1699 = vsel %vm46, %v1694, 0
    %1701 = vmatprep.subr.bf16.mxu0 0
    %1702 = vmatpush1.bf16.msra.mxu0 0
    %1703 = vmatprep.subr.bf16.mxu0 0
    %1704 = vmatpush1.bf16.msra.mxu0 0
    %1705 = vmatprep.subr.bf16.mxu0 0
    %1706 = vmatpush1.bf16.msra.mxu0 0
    %1707 = vmatprep.subr.bf16.mxu0 0
    %1708 = vmatpush1.bf16.msra.mxu0 0
    %1709 = vmatprep.subr.bf16.mxu0 0
    %1710 = vmatpush1.bf16.msra.mxu0 0
    %1711 = vmatprep.subr.bf16.mxu0 0
    %1712 = vmatpush1.bf16.msra.mxu0 0
    %1713 = vmatprep.subr.bf16.mxu0 0
    %1714 = vmatpush1.bf16.msra.mxu0 0
    %1715 = vmatprep.subr.bf16.mxu0 0
    %1716 = vmatpush1.bf16.msra.mxu0 %v1699
    %1717 = vmatprep.subr.bf16.mxu0 0
    %1718 = vmatpush2.bf16.msra.mxu0 0
    %1719 = vmatprep.subr.bf16.mxu0 0
    %1720 = vmatpush2.bf16.msra.mxu0 0
    %1721 = vmatprep.subr.bf16.mxu0 0
    %1722 = vmatpush2.bf16.msra.mxu0 0
    %1723 = vmatprep.subr.bf16.mxu0 0
    %1724 = vmatpush2.bf16.msra.mxu0 0
    %1725 = vmatprep.subr.bf16.mxu0 0
    %1726 = vmatpush2.bf16.msra.mxu0 0
    %1727 = vmatprep.subr.bf16.mxu0 0
    %1728 = vmatpush2.bf16.msra.mxu0 0
    %1729 = vmatprep.subr.bf16.mxu0 0
    %1730 = vmatpush2.bf16.msra.mxu0 0
    %1731 = vmatprep.subr.bf16.mxu0 0
    %1732 = vmatpush2.bf16.msra.mxu0 0
    %1733 = vmatprep.mubr.bf16.mxu0 0
    %1734 = vmatmul.mubr.bf16.gmra.mxu0 %v1696
    %v1735 = vpop.f32.mrf.mxu0
    %v1736 = vadd.f32 0.0, %v1735
    %v1737 = vpop.f32.mrf.mxu0
    %v1738 = vpop.f32.mrf.mxu0
    %v1739 = vadd.f32 0.0, %v1738
    %v1740 = vpop.f32.mrf.mxu0
    %1741 = vdwg.mxu0
    %v1742 = vadd.f32 %v1681, %v1736
    %v1743 = vadd.f32 %v1682, %v1739
    %v1744 = vld [vmem:[%s715] sm:$0xf]
    %v1745 = vld [vmem:[%s715 + $0x4] sm:$0xf]
    %v1748 = vunpack.c.l.b16 %v1744
    %v1749 = vunpack.c.l.b16 %v1745
    %v1750 = vpack.c.b16 %v1749, %v1748
    %1751 = vrot.lane.b32.xlu0 %v1627, 118
    %v1752 = vpop.permute.xlu0 %1751
    %1753 = vrot.lane.b32.xlu0 %v1628, 118
    %v1754 = vpop.permute.xlu0 %1753
    %v1755 = vsel %vm218, %v1752, %v1754
    %v1757 = vsel %vm42, %v1750, 0
    %v1760 = vsel %vm46, %v1755, 0
    %1762 = vmatprep.subr.bf16.mxu0 0
    %1763 = vmatpush1.bf16.msra.mxu0 0
    %1764 = vmatprep.subr.bf16.mxu0 0
    %1765 = vmatpush1.bf16.msra.mxu0 0
    %1766 = vmatprep.subr.bf16.mxu0 0
    %1767 = vmatpush1.bf16.msra.mxu0 0
    %1768 = vmatprep.subr.bf16.mxu0 0
    %1769 = vmatpush1.bf16.msra.mxu0 0
    %1770 = vmatprep.subr.bf16.mxu0 0
    %1771 = vmatpush1.bf16.msra.mxu0 0
    %1772 = vmatprep.subr.bf16.mxu0 0
    %1773 = vmatpush1.bf16.msra.mxu0 0
    %1774 = vmatprep.subr.bf16.mxu0 0
    %1775 = vmatpush1.bf16.msra.mxu0 0
    %1776 = vmatprep.subr.bf16.mxu0 0
    %1777 = vmatpush1.bf16.msra.mxu0 %v1760
    %1778 = vmatprep.subr.bf16.mxu0 0
    %1779 = vmatpush2.bf16.msra.mxu0 0
    %1780 = vmatprep.subr.bf16.mxu0 0
    %1781 = vmatpush2.bf16.msra.mxu0 0
    %1782 = vmatprep.subr.bf16.mxu0 0
    %1783 = vmatpush2.bf16.msra.mxu0 0
    %1784 = vmatprep.subr.bf16.mxu0 0
    %1785 = vmatpush2.bf16.msra.mxu0 0
    %1786 = vmatprep.subr.bf16.mxu0 0
    %1787 = vmatpush2.bf16.msra.mxu0 0
    %1788 = vmatprep.subr.bf16.mxu0 0
    %1789 = vmatpush2.bf16.msra.mxu0 0
    %1790 = vmatprep.subr.bf16.mxu0 0
    %1791 = vmatpush2.bf16.msra.mxu0 0
    %1792 = vmatprep.subr.bf16.mxu0 0
    %1793 = vmatpush2.bf16.msra.mxu0 0
    %1794 = vmatprep.mubr.bf16.mxu0 0
    %1795 = vmatmul.mubr.bf16.gmra.mxu0 %v1757
    %v1796 = vpop.f32.mrf.mxu0
    %v1797 = vadd.f32 0.0, %v1796
    %v1798 = vpop.f32.mrf.mxu0
    %v1799 = vpop.f32.mrf.mxu0
    %v1800 = vadd.f32 0.0, %v1799
    %v1801 = vpop.f32.mrf.mxu0
    %1802 = vdwg.mxu0
    %v1803 = vadd.f32 %v1742, %v1797
    %v1804 = vadd.f32 %v1743, %v1800
    %s1805 = scalar_lea.vmem %s0, 28
    %v1806 = vld [vmem:[%s1805] sm:$0xf]
    %v1807 = vld [vmem:[%s779] sm:$0xf]
    %v1808 = vld [vmem:[%s779 + $0x4] sm:$0xf]
    %v1811 = vunpack.c.l.b16 %v1807
    %v1812 = vunpack.c.l.b16 %v1808
    %v1813 = vpack.c.b16 %v1812, %v1811
    %v1815 = vsel %vm42, %v1813, 0
    %v1818 = vsel %vm46, %v1806, 0
    %1820 = vmatprep.subr.bf16.mxu0 0
    %1821 = vmatpush1.bf16.msra.mxu0 0
    %1822 = vmatprep.subr.bf16.mxu0 0
    %1823 = vmatpush1.bf16.msra.mxu0 0
    %1824 = vmatprep.subr.bf16.mxu0 0
    %1825 = vmatpush1.bf16.msra.mxu0 0
    %1826 = vmatprep.subr.bf16.mxu0 0
    %1827 = vmatpush1.bf16.msra.mxu0 0
    %1828 = vmatprep.subr.bf16.mxu0 0
    %1829 = vmatpush1.bf16.msra.mxu0 0
    %1830 = vmatprep.subr.bf16.mxu0 0
    %1831 = vmatpush1.bf16.msra.mxu0 0
    %1832 = vmatprep.subr.bf16.mxu0 0
    %1833 = vmatpush1.bf16.msra.mxu0 0
    %1834 = vmatprep.subr.bf16.mxu0 0
    %1835 = vmatpush1.bf16.msra.mxu0 %v1818
    %1836 = vmatprep.subr.bf16.mxu0 0
    %1837 = vmatpush2.bf16.msra.mxu0 0
    %1838 = vmatprep.subr.bf16.mxu0 0
    %1839 = vmatpush2.bf16.msra.mxu0 0
    %1840 = vmatprep.subr.bf16.mxu0 0
    %1841 = vmatpush2.bf16.msra.mxu0 0
    %1842 = vmatprep.subr.bf16.mxu0 0
    %1843 = vmatpush2.bf16.msra.mxu0 0
    %1844 = vmatprep.subr.bf16.mxu0 0
    %1845 = vmatpush2.bf16.msra.mxu0 0
    %1846 = vmatprep.subr.bf16.mxu0 0
    %1847 = vmatpush2.bf16.msra.mxu0 0
    %1848 = vmatprep.subr.bf16.mxu0 0
    %1849 = vmatpush2.bf16.msra.mxu0 0
    %1850 = vmatprep.subr.bf16.mxu0 0
    %1851 = vmatpush2.bf16.msra.mxu0 0
    %1852 = vmatprep.mubr.bf16.mxu0 0
    %1853 = vmatmul.mubr.bf16.gmra.mxu0 %v1815
    %v1854 = vpop.f32.mrf.mxu0
    %v1855 = vadd.f32 0.0, %v1854
    %v1856 = vpop.f32.mrf.mxu0
    %v1857 = vpop.f32.mrf.mxu0
    %v1858 = vadd.f32 0.0, %v1857
    %v1859 = vpop.f32.mrf.mxu0
    %1860 = vdwg.mxu0
    %v1861 = vadd.f32 %v1803, %v1855
    %v1862 = vadd.f32 %v1804, %v1858
    %v1863 = vld [vmem:[%s836] sm:$0xf]
    %v1864 = vld [vmem:[%s836 + $0x4] sm:$0xf]
    %v1867 = vunpack.c.l.b16 %v1863
    %v1868 = vunpack.c.l.b16 %v1864
    %v1869 = vpack.c.b16 %v1868, %v1867
    %v1872 = vunpack.c.l.s4 1983009808
    %v1873 = vunpack.c.0.s8 %v1872
    %v1874 = vlaneseq
    %v1875 = vshrl.u32 %v1874, 7
    %v1876 = vsub.s32 %v1873, %v1875
    %v1877 = vrot.slane %v1806, %v1876
    %v1878 = vcombine.high %v1877, %v1877
    %1879 = vrot.lane.b32.xlu0 %v1877, 127
    %v1880 = vpop.permute.xlu0 %1879
    %1881 = vrot.lane.b32.xlu0 %v1878, 127
    %v1882 = vpop.permute.xlu0 %1881
    %v1883 = vsel %vm40, %v1880, %v1882
    %v1885 = vsel %vm42, %v1869, 0
    %v1888 = vsel %vm46, %v1883, 0
    %1890 = vmatprep.subr.bf16.mxu0 0
    %1891 = vmatpush1.bf16.msra.mxu0 0
    %1892 = vmatprep.subr.bf16.mxu0 0
    %1893 = vmatpush1.bf16.msra.mxu0 0
    %1894 = vmatprep.subr.bf16.mxu0 0
    %1895 = vmatpush1.bf16.msra.mxu0 0
    %1896 = vmatprep.subr.bf16.mxu0 0
    %1897 = vmatpush1.bf16.msra.mxu0 0
    %1898 = vmatprep.subr.bf16.mxu0 0
    %1899 = vmatpush1.bf16.msra.mxu0 0
    %1900 = vmatprep.subr.bf16.mxu0 0
    %1901 = vmatpush1.bf16.msra.mxu0 0
    %1902 = vmatprep.subr.bf16.mxu0 0
    %1903 = vmatpush1.bf16.msra.mxu0 0
    %1904 = vmatprep.subr.bf16.mxu0 0
    %1905 = vmatpush1.bf16.msra.mxu0 %v1888
    %1906 = vmatprep.subr.bf16.mxu0 0
    %1907 = vmatpush2.bf16.msra.mxu0 0
    %1908 = vmatprep.subr.bf16.mxu0 0
    %1909 = vmatpush2.bf16.msra.mxu0 0
    %1910 = vmatprep.subr.bf16.mxu0 0
    %1911 = vmatpush2.bf16.msra.mxu0 0
    %1912 = vmatprep.subr.bf16.mxu0 0
    %1913 = vmatpush2.bf16.msra.mxu0 0
    %1914 = vmatprep.subr.bf16.mxu0 0
    %1915 = vmatpush2.bf16.msra.mxu0 0
    %1916 = vmatprep.subr.bf16.mxu0 0
    %1917 = vmatpush2.bf16.msra.mxu0 0
    %1918 = vmatprep.subr.bf16.mxu0 0
    %1919 = vmatpush2.bf16.msra.mxu0 0
    %1920 = vmatprep.subr.bf16.mxu0 0
    %1921 = vmatpush2.bf16.msra.mxu0 0
    %1922 = vmatprep.mubr.bf16.mxu0 0
    %1923 = vmatmul.mubr.bf16.gmra.mxu0 %v1885
    %v1924 = vpop.f32.mrf.mxu0
    %v1925 = vadd.f32 0.0, %v1924
    %v1926 = vpop.f32.mrf.mxu0
    %v1927 = vpop.f32.mrf.mxu0
    %v1928 = vadd.f32 0.0, %v1927
    %v1929 = vpop.f32.mrf.mxu0
    %1930 = vdwg.mxu0
    %v1931 = vadd.f32 %v1861, %v1925
    %v1932 = vadd.f32 %v1862, %v1928
    %v1933 = vld [vmem:[%s907] sm:$0xf]
    %v1934 = vld [vmem:[%s907 + $0x4] sm:$0xf]
    %v1937 = vunpack.c.l.b16 %v1933
    %v1938 = vunpack.c.l.b16 %v1934
    %v1939 = vpack.c.b16 %v1938, %v1937
    %1940 = vrot.lane.b32.xlu0 %v1877, 119
    %v1941 = vpop.permute.xlu0 %1940
    %1942 = vrot.lane.b32.xlu0 %v1878, 119
    %v1943 = vpop.permute.xlu0 %1942
    %v1944 = vsel %vm155, %v1941, %v1943
    %v1946 = vsel %vm42, %v1939, 0
    %v1949 = vsel %vm46, %v1944, 0
    %1951 = vmatprep.subr.bf16.mxu0 0
    %1952 = vmatpush1.bf16.msra.mxu0 0
    %1953 = vmatprep.subr.bf16.mxu0 0
    %1954 = vmatpush1.bf16.msra.mxu0 0
    %1955 = vmatprep.subr.bf16.mxu0 0
    %1956 = vmatpush1.bf16.msra.mxu0 0
    %1957 = vmatprep.subr.bf16.mxu0 0
    %1958 = vmatpush1.bf16.msra.mxu0 0
    %1959 = vmatprep.subr.bf16.mxu0 0
    %1960 = vmatpush1.bf16.msra.mxu0 0
    %1961 = vmatprep.subr.bf16.mxu0 0
    %1962 = vmatpush1.bf16.msra.mxu0 0
    %1963 = vmatprep.subr.bf16.mxu0 0
    %1964 = vmatpush1.bf16.msra.mxu0 0
    %1965 = vmatprep.subr.bf16.mxu0 0
    %1966 = vmatpush1.bf16.msra.mxu0 %v1949
    %1967 = vmatprep.subr.bf16.mxu0 0
    %1968 = vmatpush2.bf16.msra.mxu0 0
    %1969 = vmatprep.subr.bf16.mxu0 0
    %1970 = vmatpush2.bf16.msra.mxu0 0
    %1971 = vmatprep.subr.bf16.mxu0 0
    %1972 = vmatpush2.bf16.msra.mxu0 0
    %1973 = vmatprep.subr.bf16.mxu0 0
    %1974 = vmatpush2.bf16.msra.mxu0 0
    %1975 = vmatprep.subr.bf16.mxu0 0
    %1976 = vmatpush2.bf16.msra.mxu0 0
    %1977 = vmatprep.subr.bf16.mxu0 0
    %1978 = vmatpush2.bf16.msra.mxu0 0
    %1979 = vmatprep.subr.bf16.mxu0 0
    %1980 = vmatpush2.bf16.msra.mxu0 0
    %1981 = vmatprep.subr.bf16.mxu0 0
    %1982 = vmatpush2.bf16.msra.mxu0 0
    %1983 = vmatprep.mubr.bf16.mxu0 0
    %1984 = vmatmul.mubr.bf16.gmra.mxu0 %v1946
    %v1985 = vpop.f32.mrf.mxu0
    %v1986 = vadd.f32 0.0, %v1985
    %v1987 = vpop.f32.mrf.mxu0
    %v1988 = vpop.f32.mrf.mxu0
    %v1989 = vadd.f32 0.0, %v1988
    %v1990 = vpop.f32.mrf.mxu0
    %1991 = vdwg.mxu0
    %v1992 = vadd.f32 %v1931, %v1986
    %v1993 = vadd.f32 %v1932, %v1989
    %v1994 = vld [vmem:[%s969] sm:$0xf]
    %v1995 = vld [vmem:[%s969 + $0x4] sm:$0xf]
    %v1998 = vunpack.c.l.b16 %v1994
    %v1999 = vunpack.c.l.b16 %v1995
    %v2000 = vpack.c.b16 %v1999, %v1998
    %2001 = vrot.lane.b32.xlu0 %v1877, 118
    %v2002 = vpop.permute.xlu0 %2001
    %2003 = vrot.lane.b32.xlu0 %v1878, 118
    %v2004 = vpop.permute.xlu0 %2003
    %v2005 = vsel %vm218, %v2002, %v2004
    %v2007 = vsel %vm42, %v2000, 0
    %v2010 = vsel %vm46, %v2005, 0
    %2012 = vmatprep.subr.bf16.mxu0 0
    %2013 = vmatpush1.bf16.msra.mxu0 0
    %2014 = vmatprep.subr.bf16.mxu0 0
    %2015 = vmatpush1.bf16.msra.mxu0 0
    %2016 = vmatprep.subr.bf16.mxu0 0
    %2017 = vmatpush1.bf16.msra.mxu0 0
    %2018 = vmatprep.subr.bf16.mxu0 0
    %2019 = vmatpush1.bf16.msra.mxu0 0
    %2020 = vmatprep.subr.bf16.mxu0 0
    %2021 = vmatpush1.bf16.msra.mxu0 0
    %2022 = vmatprep.subr.bf16.mxu0 0
    %2023 = vmatpush1.bf16.msra.mxu0 0
    %2024 = vmatprep.subr.bf16.mxu0 0
    %2025 = vmatpush1.bf16.msra.mxu0 0
    %2026 = vmatprep.subr.bf16.mxu0 0
    %2027 = vmatpush1.bf16.msra.mxu0 %v2010
    %2028 = vmatprep.subr.bf16.mxu0 0
    %2029 = vmatpush2.bf16.msra.mxu0 0
    %2030 = vmatprep.subr.bf16.mxu0 0
    %2031 = vmatpush2.bf16.msra.mxu0 0
    %2032 = vmatprep.subr.bf16.mxu0 0
    %2033 = vmatpush2.bf16.msra.mxu0 0
    %2034 = vmatprep.subr.bf16.mxu0 0
    %2035 = vmatpush2.bf16.msra.mxu0 0
    %2036 = vmatprep.subr.bf16.mxu0 0
    %2037 = vmatpush2.bf16.msra.mxu0 0
    %2038 = vmatprep.subr.bf16.mxu0 0
    %2039 = vmatpush2.bf16.msra.mxu0 0
    %2040 = vmatprep.subr.bf16.mxu0 0
    %2041 = vmatpush2.bf16.msra.mxu0 0
    %2042 = vmatprep.subr.bf16.mxu0 0
    %2043 = vmatpush2.bf16.msra.mxu0 0
    %2044 = vmatprep.mubr.bf16.mxu0 0
    %2045 = vmatmul.mubr.bf16.gmra.mxu0 %v2007
    %v2046 = vpop.f32.mrf.mxu0
    %v2047 = vadd.f32 0.0, %v2046
    %v2048 = vpop.f32.mrf.mxu0
    %v2049 = vpop.f32.mrf.mxu0
    %v2050 = vadd.f32 0.0, %v2049
    %v2051 = vpop.f32.mrf.mxu0
    %2052 = vdwg.mxu0
    %v2053 = vadd.f32 %v1992, %v2047
    %v2054 = vadd.f32 %v1993, %v2050
    %v2055 = vld [vmem:[%s2] sm:$0xff]
    %v2056 = vld [vmem:[%s2 + $0x8] sm:$0xff]
    %2058 = vset.pattern.permute.xlu0 0
    %2059 = vperm.xlu0 %2058, %v2055
    %v2060 = vpop.permute.xlu0 %2059
    %2063 = vset.pattern.permute.xlu0 0
    %2064 = vperm.xlu0 %2063, %v2056
    %v2065 = vpop.permute.xlu0 %2064
    %v2067 = vadd.f32 %v2053, %v2060
    %v2068 = vadd.f32 %v2054, %v2065
    %v2069 = vmul.f32 %v2067, 0.2
    %v2070 = vmul.f32 %v2068, 0.2
    %v2071 = vmax.f32 %v2067, %v2069
    %v2072 = vmax.f32 %v2068, %v2070
    %v2073 = vpack.c.bf16 %v2072, %v2071
    %v2075 = vunpack.c.l.b16 %v2073
    %v2076 = vunpack.c.h.b16 %v2073
    %v2077 = vpack.c.b16 %v2075, %v2075
    %v2078 = vpack.c.b16 %v2076, %v2076
    %s2081 = scalar_lea.vmem [#allocation2], 8
    %2082 = vst [vmem:[%s2081] sm:$0xf] %v2077
    %2083 = vst [vmem:[%s2081 + $0x4] sm:$0xf] %v2078
    // Predicated region
    $region14: #{tpu_custom_call.1} parent=1 // pred_check
      _
    $region15: #{tpu_custom_call.1} parent=1 // pred_check_branch
      %2085 = sbr.rel (0) target = $region17
    $region16: #{tpu_custom_call.1} parent=1 // pred_region
      %s2087 = ssub.s32 256, 256
      %2088 = vsyncadd [#allocation3], %s2087
      %s2089 = sshll.u32 [#allocation2], 4
      %s2090 = int_to_ptr.vmem [resolvable:$true] %s2089
      %2095 = dma.vmem_to_hbm [thread:$0]  %s2090, 256, %s3, [#allocation3], 64, 64, 4
    $region17: #{tpu_custom_call.1} parent=1 // pred_fallthru
      _
    // Predicated region
    $region18: #{tpu_custom_call.1} parent=1 // pred_check
      _
    $region19: #{tpu_custom_call.1} parent=1 // pred_check_branch
      %2097 = sbr.rel (0) target = $region21
    $region20: #{tpu_custom_call.1} parent=1 // pred_region
      %2098 = dma.done [#allocation3], 256
    $region21: #{tpu_custom_call.1} parent=1 // pred_fallthru
      _
    %2099 = vsyncpa [#allocation3], 1

</llo_original>
